<compile_context>
chip_gen: v7x
topology: tpu7x:2x2x1
jax: 0.10.0
libtpu: 0.0.40
codegen_flags: <defaults>
</compile_context>

<pallas_src>
import jax
import jax.numpy as jnp
from jax.experimental import pallas as pl
from jax.experimental.pallas import tpu as pltpu


def _round_up(x, m):
    return (x + m - 1) // m * m


def _sigmoid(x):
    # Hand-rolled sigmoid: exp + reciprocal are guaranteed EUP/VPU lowerings.
    return 1.0 / (1.0 + jnp.exp(-x))


def _lstm_recurrence_kernel(x_ref, wih_ref, whh_ref, b_ref, out_ref,
                            h_sc, c_sc, gx_sc):
    """One grid step = K timesteps of the LSTM for one batch shard.

    x_ref  : (K, Bs, D)   mxu dtype  time-major input slab for this block
    wih_ref: (D, 4H)      mxu dtype  resident input-projection weight
    whh_ref: (H, 4H)      mxu dtype  resident recurrent weight
    b_ref  : (1, 4H)      f32        b_ih + b_hh
    out_ref: (Bs, K, H)   f32        batch-major hidden-state slab
    h_sc/c_sc: (Bs, H)    f32        carries across time blocks
    gx_sc  : (K, Bs, 4H)  f32        per-block input-projection staging
    """
    t = pl.program_id(1)

    @pl.when(t == 0)
    def _():
        h_sc[...] = jnp.zeros_like(h_sc)
        c_sc[...] = jnp.zeros_like(c_sc)

    K, Bs, D = x_ref.shape
    H = h_sc.shape[1]
    f32 = jnp.float32

    wih = wih_ref[...]                     # (D, 4H)
    whh = whh_ref[...]                     # (H, 4H)
    bias = b_ref[...]                      # (1, 4H)
    mxu_dtype = whh.dtype

    # Hoisted input projection for the whole time block: one batched MXU
    # matmul (Bs is a multiple of 8, so the leading-dim merge is layout-free).
    x_blk = x_ref[...].reshape(K * Bs, D)
    gx = jnp.dot(x_blk, wih, preferred_element_type=f32)
    gx_sc[...] = gx.reshape(K, Bs, 4 * H) + bias

    def step(k, carry):
        h_prev, c_prev = carry
        # Only the recurrent projection remains on the serial chain.
        gates = gx_sc[k] + jnp.dot(h_prev.astype(mxu_dtype), whh,
                                   preferred_element_type=f32)
        # Contiguous gate packing: [i | f | g | o], each of width H.
        i_g = _sigmoid(gates[:, 0 * H:1 * H])
        f_g = _sigmoid(gates[:, 1 * H:2 * H])
        g_g = jnp.tanh(gates[:, 2 * H:3 * H])
        o_g = _sigmoid(gates[:, 3 * H:4 * H])
        c_new = f_g * c_prev + i_g * g_g
        h_new = o_g * jnp.tanh(c_new)
        # Batch-major store: one sublane row per timestep (off the critical
        # dependency chain, so it overlaps with the next step's matmul).
        out_ref[:, pl.ds(k, 1), :] = h_new[:, None, :].astype(out_ref.dtype)
        return h_new, c_new

    h, c = jax.lax.fori_loop(0, K, step, (h_sc[...], c_sc[...]),
                             unroll=min(K, 8))
    h_sc[...] = h
    c_sc[...] = c


def lstm_flair1_forward(x_btd, w_ih, w_hh, b_ih, b_hh, *,
                        time_block=32, batch_shards=1, mxu_dtype=None):
    """Forward pass of LSTMFlair1 (single-layer, unidirectional nn.LSTM).

    x_btd: (B, T, D) batch-first input.
    w_ih: (4H, D), w_hh: (4H, H), b_ih/b_hh: (4H,)  (PyTorch shapes, [i,f,g,o]).
    time_block:   timesteps per grid step (bigger amortizes grid overhead; 32
                  is a good default on v5e/v6e's 128 MiB VMEM).
    batch_shards: set to 2 on v7x when B >= 16 to run the two batch halves on
                  the two TensorCores (leading "parallel" grid axis).
    Returns lstm_out: (B, T, H) float32.
    """
    B, T, D = x_btd.shape
    H = w_hh.shape[1]
    G = 4 * H
    f32 = jnp.float32
    if mxu_dtype is None:
        # bf16 MXU operands on real TPUs; plain f32 elsewhere (the CPU
        # interpreter has no BF16xBF16=F32 dot).
        mxu_dtype = jnp.bfloat16 if jax.default_backend() == "tpu" else f32

    NB = max(1, int(batch_shards))
    Bp = _round_up(max(B, 1), 8 * NB)      # sublane-aligned, shardable batch
    Bs = Bp // NB                          # per-shard batch (multiple of 8)

    K = max(1, min(int(time_block), T))
    if K < T:
        K = _round_up(K, 8)                # sublane-aligned time blocks
    T_pad = _round_up(T, K)
    n_tblk = T_pad // K

    # --- Weight / bias re-layout: contiguous [i|f|g|o] columns, no padding. ---
    wih_p = jnp.asarray(w_ih, f32).T.astype(mxu_dtype)          # (D, 4H)
    whh_p = jnp.asarray(w_hh, f32).T.astype(mxu_dtype)          # (H, 4H)
    bias_p = (jnp.asarray(b_ih, f32) + jnp.asarray(b_hh, f32)).reshape(1, G)

    # --- Input: pad batch/time with zeros, go time-major, cast for the MXU. ---
    x_p = jnp.pad(jnp.asarray(x_btd, f32),
                  ((0, Bp - B), (0, T_pad - T), (0, 0)))
    x_tmaj = jnp.transpose(x_p, (1, 0, 2)).astype(mxu_dtype)    # (T_pad, Bp, D)

    # --- VMEM budget (double-buffered streams + resident weights + scratch),
    #     capped at 48 MiB so it always leaves headroom on v7x (64 MiB). ---
    isz = jnp.dtype(mxu_dtype).itemsize
    vmem_need = (2 * K * Bs * D * isz      # x blocks
                 + 2 * Bs * K * H * 4      # output blocks
                 + 2 * D * G * isz         # W_ih (double-buffered constant)
                 + 2 * H * G * isz         # W_hh
                 + 2 * G * 4               # bias
                 + 2 * Bs * H * 4          # h/c carries
                 + K * Bs * G * 4)         # gx staging
    vmem_limit = int(min(max(2 * vmem_need + (4 << 20), 16 << 20), 48 << 20))

    out = pl.pallas_call(
        _lstm_recurrence_kernel,
        out_shape=jax.ShapeDtypeStruct((Bp, T_pad, H), f32),
        grid_spec=pltpu.PrefetchScalarGridSpec(
            num_scalar_prefetch=0,
            grid=(NB, n_tblk),
            in_specs=[
                pl.BlockSpec((K, Bs, D), lambda b, t: (t, b, 0)),
                pl.BlockSpec((D, G), lambda b, t: (0, 0)),
                pl.BlockSpec((H, G), lambda b, t: (0, 0)),
                pl.BlockSpec((1, G), lambda b, t: (0, 0)),
            ],
            out_specs=pl.BlockSpec((Bs, K, H), lambda b, t: (b, t, 0)),
            scratch_shapes=[
                pltpu.VMEM((Bs, H), f32),        # h carry
                pltpu.VMEM((Bs, H), f32),        # c carry
                pltpu.VMEM((K, Bs, G), f32),     # per-block input projection
            ],
        ),
        compiler_params=pltpu.CompilerParams(
            # Batch shards are independent; the time axis is a true recurrence.
            dimension_semantics=("parallel", "arbitrary"),
            vmem_limit_bytes=vmem_limit,
        ),
    )(x_tmaj, wih_p, whh_p, bias_p)

    # Already batch-major; just drop batch/time padding.
    return out[:B, :T, :]


def _lstm_reference(x_btd, w_ih, w_hh, b_ih, b_hh, mxu_dtype=jnp.float32):
    """Pure-JAX reference (lax.scan) matching PyTorch nn.LSTM gate order."""
    B, T, D = x_btd.shape
    H = w_hh.shape[1]
    bias = (b_ih + b_hh).astype(jnp.float32)
    wih_t = w_ih.T.astype(mxu_dtype)
    whh_t = w_hh.T.astype(mxu_dtype)
    hp = jax.lax.Precision.HIGHEST

    def step(carry, x_t):
        h, c = carry
        gates = (jnp.dot(x_t.astype(mxu_dtype), wih_t,
                         preferred_element_type=jnp.float32, precision=hp)
                 + jnp.dot(h.astype(mxu_dtype), whh_t,
                           preferred_element_type=jnp.float32, precision=hp)
                 + bias)
        i = _sigmoid(gates[:, 0 * H:1 * H])
        f = _sigmoid(gates[:, 1 * H:2 * H])
        g = jnp.tanh(gates[:, 2 * H:3 * H])
        o = _sigmoid(gates[:, 3 * H:4 * H])
        c = f * c + i * g
        h = o * jnp.tanh(c)
        return (h, c), h

    x_tbd = jnp.transpose(x_btd, (1, 0, 2))
    h0 = jnp.zeros((B, H), jnp.float32)
    c0 = jnp.zeros((B, H), jnp.float32)
    _, out_tbh = jax.lax.scan(step, (h0, c0), x_tbd)
    return jnp.transpose(out_tbh, (1, 0, 2))


if __name__ == "__main__":
    # Small shapes consistent with the module; T=12 with time_block=8
    # exercises the cross-block h/c carry and the time/batch padding paths.
    B, T, D, H = 2, 12, 16, 32

    key = jax.random.PRNGKey(0)
    k_x, k_wih, k_whh, k_bih, k_bhh = jax.random.split(key, 5)

    # PyTorch-style init U(-1/sqrt(H), 1/sqrt(H)).
    scale = 1.0 / jnp.sqrt(jnp.float32(H))
    x = jax.random.normal(k_x, (B, T, D), dtype=jnp.float32)
    w_ih = jax.random.uniform(k_wih, (4 * H, D), minval=-scale, maxval=scale)
    w_hh = jax.random.uniform(k_whh, (4 * H, H), minval=-scale, maxval=scale)
    b_ih = jax.random.uniform(k_bih, (4 * H,), minval=-scale, maxval=scale)
    b_hh = jax.random.uniform(k_bhh, (4 * H,), minval=-scale, maxval=scale)

    # 1) f32 configuration, time-blocked (carry + padding paths); all backends.
    out_f32 = lstm_flair1_forward(x, w_ih, w_hh, b_ih, b_hh,
                                  time_block=8, mxu_dtype=jnp.float32)
    out_f32 = jax.block_until_ready(out_f32)
    ref_f32 = _lstm_reference(x, w_ih, w_hh, b_ih, b_hh, jnp.float32)
    assert out_f32.shape == (B, T, H)
    assert jnp.allclose(out_f32, ref_f32, atol=1e-3, rtol=1e-3), \
        float(jnp.max(jnp.abs(out_f32 - ref_f32)))

    # 2) f32 with a 2-way parallel batch axis (v7x megacore layout).
    B2 = 16
    x2 = jax.random.normal(jax.random.PRNGKey(1), (B2, T, D), dtype=jnp.float32)
    out2 = lstm_flair1_forward(x2, w_ih, w_hh, b_ih, b_hh,
                               time_block=8, batch_shards=2,
                               mxu_dtype=jnp.float32)
    out2 = jax.block_until_ready(out2)
    ref2 = _lstm_reference(x2, w_ih, w_hh, b_ih, b_hh, jnp.float32)
    assert out2.shape == (B2, T, H)
    assert jnp.allclose(out2, ref2, atol=1e-3, rtol=1e-3), \
        float(jnp.max(jnp.abs(out2 - ref2)))

    # 3) bf16-MXU production path (TPU only; skipped on CPU interpret where
    #    BF16xBF16=F32 dots are unsupported).
    if jax.default_backend() == "tpu":
        out_bf16 = lstm_flair1_forward(x, w_ih, w_hh, b_ih, b_hh)  # defaults
        out_bf16 = jax.block_until_ready(out_bf16)
        ref_bf16 = _lstm_reference(x, w_ih, w_hh, b_ih, b_hh, jnp.bfloat16)
        assert out_bf16.shape == (B, T, H)
        assert jnp.allclose(out_bf16, ref_bf16, atol=5e-2, rtol=5e-2), \
            float(jnp.max(jnp.abs(out_bf16 - ref_bf16)))

    print("KERNEL_OK")
</pallas_src>

<mosaic_0001>
module attributes {stable_mosaic.version = 11 : i64} {
  func.func @_lstm_recurrence_kernel(%arg0: i32, %arg1: i32, %arg2: memref<8x8x16xf32, #tpu.memory_space<vmem>>, %arg3: memref<16x128xf32, #tpu.memory_space<vmem>>, %arg4: memref<32x128xf32, #tpu.memory_space<vmem>>, %arg5: memref<1x128xf32, #tpu.memory_space<vmem>>, %arg6: memref<8x8x32xf32, #tpu.memory_space<vmem>>, %arg7: memref<8x32xf32, #tpu.memory_space<vmem>>, %arg8: memref<8x32xf32, #tpu.memory_space<vmem>>, %arg9: memref<8x8x128xf32, #tpu.memory_space<vmem>>) attributes {dimension_semantics = [#tpu.dimension_semantics<parallel>, #tpu.dimension_semantics<arbitrary>], iteration_bounds = array<i64: 1, 2>, scalar_prefetch = 0 : i64, scratch_operands = 3 : i64, tpu.core_type = #tpu.core_type<tc>, window_params = [{transform_indices = @transform_0, window_bounds = array<i64: 8, 8, 16>}, {pipeline_mode = #tpu.pipeline_mode<synchronous>, transform_indices = @transform_1, window_bounds = array<i64: 16, 128>}, {pipeline_mode = #tpu.pipeline_mode<synchronous>, transform_indices = @transform_2, window_bounds = array<i64: 32, 128>}, {pipeline_mode = #tpu.pipeline_mode<synchronous>, transform_indices = @transform_3, window_bounds = array<i64: 1, 128>}, {transform_indices = @transform_4, window_bounds = array<i64: 8, 8, 32>}]} {
    %c0_i32 = arith.constant 0 : i32
    %0 = arith.cmpi eq, %arg1, %c0_i32 : i32
    %1 = arith.extui %0 : i1 to i32
    %c0_i32_0 = arith.constant 0 : i32
    %2 = arith.cmpi ne, %1, %c0_i32_0 : i32
    scf.if %2 {
      %cst_133 = arith.constant 0.000000e+00 : f32
      %330 = vector.broadcast %cst_133 : f32 to vector<8x32xf32>
      %c0_134 = arith.constant 0 : index
      %c0_135 = arith.constant 0 : index
      %331 = vector.load %arg7[%c0_134, %c0_135] : memref<8x32xf32, #tpu.memory_space<vmem>>, vector<8x32xf32>
      tpu.vector_store %arg7[%c0_134, %c0_135], %330 {strides = array<i32>} : memref<8x32xf32, #tpu.memory_space<vmem>>, vector<8x32xf32>,
      %cst_136 = arith.constant 0.000000e+00 : f32
      %332 = vector.broadcast %cst_136 : f32 to vector<8x32xf32>
      %c0_137 = arith.constant 0 : index
      %c0_138 = arith.constant 0 : index
      %333 = vector.load %arg8[%c0_137, %c0_138] : memref<8x32xf32, #tpu.memory_space<vmem>>, vector<8x32xf32>
      tpu.vector_store %arg8[%c0_137, %c0_138], %332 {strides = array<i32>} : memref<8x32xf32, #tpu.memory_space<vmem>>, vector<8x32xf32>,
    } else {
    }
    %c0 = arith.constant 0 : index
    %c0_1 = arith.constant 0 : index
    %3 = vector.load %arg3[%c0, %c0_1] : memref<16x128xf32, #tpu.memory_space<vmem>>, vector<16x128xf32>
    %c0_2 = arith.constant 0 : index
    %c0_3 = arith.constant 0 : index
    %4 = vector.load %arg4[%c0_2, %c0_3] : memref<32x128xf32, #tpu.memory_space<vmem>>, vector<32x128xf32>
    %c0_4 = arith.constant 0 : index
    %c0_5 = arith.constant 0 : index
    %5 = vector.load %arg5[%c0_4, %c0_5] : memref<1x128xf32, #tpu.memory_space<vmem>>, vector<1x128xf32>
    %c0_6 = arith.constant 0 : index
    %c0_7 = arith.constant 0 : index
    %c0_8 = arith.constant 0 : index
    %6 = vector.load %arg2[%c0_6, %c0_7, %c0_8] : memref<8x8x16xf32, #tpu.memory_space<vmem>>, vector<8x8x16xf32>
    %7 = vector.shape_cast %6 : vector<8x8x16xf32> to vector<64x16xf32>
    %cst = arith.constant dense<0.000000e+00> : vector<64x128xf32>
    %8 = tpu.matmul %7, %3, %cst {dimension_numbers = #tpu.dot_dimension_numbers<[1], [0], [0], [1], [0, 0, 1, 1], [], []>} : vector<64x16xf32>, vector<16x128xf32>, vector<64x128xf32> -> vector<64x128xf32>
    %9 = vector.shape_cast %8 : vector<64x128xf32> to vector<8x8x128xf32>
    %10 = vector.shape_cast %5 : vector<1x128xf32> to vector<1x1x128xf32>
    %11 = vector.broadcast %10 : vector<1x1x128xf32> to vector<8x8x128xf32>
    %12 = arith.addf %9, %11 : vector<8x8x128xf32>
    %c0_9 = arith.constant 0 : index
    %c0_10 = arith.constant 0 : index
    %c0_11 = arith.constant 0 : index
    %13 = vector.load %arg9[%c0_9, %c0_10, %c0_11] : memref<8x8x128xf32, #tpu.memory_space<vmem>>, vector<8x8x128xf32>
    tpu.vector_store %arg9[%c0_9, %c0_10, %c0_11], %12 {strides = array<i32>} : memref<8x8x128xf32, #tpu.memory_space<vmem>>, vector<8x8x128xf32>,
    %c0_12 = arith.constant 0 : index
    %c0_13 = arith.constant 0 : index
    %14 = vector.load %arg7[%c0_12, %c0_13] : memref<8x32xf32, #tpu.memory_space<vmem>>, vector<8x32xf32>
    %c0_14 = arith.constant 0 : index
    %c0_15 = arith.constant 0 : index
    %15 = vector.load %arg8[%c0_14, %c0_15] : memref<8x32xf32, #tpu.memory_space<vmem>>, vector<8x32xf32>
    %c0_i32_16 = arith.constant 0 : i32
    %16 = arith.index_cast %c0_i32_16 : i32 to index
    %c0_17 = arith.constant 0 : index
    %c0_18 = arith.constant 0 : index
    %17 = vector.load %arg9[%16, %c0_17, %c0_18] : memref<8x8x128xf32, #tpu.memory_space<vmem>>, vector<1x8x128xf32>
    %18 = vector.shape_cast %17 : vector<1x8x128xf32> to vector<8x128xf32>
    %cst_19 = arith.constant dense<0.000000e+00> : vector<8x128xf32>
    %19 = tpu.matmul %14, %4, %cst_19 {dimension_numbers = #tpu.dot_dimension_numbers<[1], [0], [0], [1], [0, 0, 1, 1], [], []>} : vector<8x32xf32>, vector<32x128xf32>, vector<8x128xf32> -> vector<8x128xf32>
    %20 = arith.addf %18, %19 : vector<8x128xf32>
    %21 = vector.extract_strided_slice %20 {offsets = [0, 0], sizes = [8, 32], strides = [1, 1]} : vector<8x128xf32> to vector<8x32xf32>
    %cst_20 = arith.constant 0.000000e+00 : f32
    %22 = vector.broadcast %cst_20 : f32 to vector<8x32xf32>
    %23 = arith.subf %22, %21 : vector<8x32xf32>
    %24 = math.exp %23 : vector<8x32xf32>
    %cst_21 = arith.constant 1.000000e+00 : f32
    %25 = vector.broadcast %cst_21 : f32 to vector<8x32xf32>
    %26 = arith.addf %25, %24 : vector<8x32xf32>
    %cst_22 = arith.constant 1.000000e+00 : f32
    %27 = vector.broadcast %cst_22 : f32 to vector<8x32xf32>
    %28 = arith.divf %27, %26 : vector<8x32xf32>
    %29 = vector.extract_strided_slice %20 {offsets = [0, 32], sizes = [8, 32], strides = [1, 1]} : vector<8x128xf32> to vector<8x32xf32>
    %cst_23 = arith.constant 0.000000e+00 : f32
    %30 = vector.broadcast %cst_23 : f32 to vector<8x32xf32>
    %31 = arith.subf %30, %29 : vector<8x32xf32>
    %32 = math.exp %31 : vector<8x32xf32>
    %cst_24 = arith.constant 1.000000e+00 : f32
    %33 = vector.broadcast %cst_24 : f32 to vector<8x32xf32>
    %34 = arith.addf %33, %32 : vector<8x32xf32>
    %cst_25 = arith.constant 1.000000e+00 : f32
    %35 = vector.broadcast %cst_25 : f32 to vector<8x32xf32>
    %36 = arith.divf %35, %34 : vector<8x32xf32>
    %37 = vector.extract_strided_slice %20 {offsets = [0, 64], sizes = [8, 32], strides = [1, 1]} : vector<8x128xf32> to vector<8x32xf32>
    %38 = math.tanh %37 : vector<8x32xf32>
    %39 = vector.extract_strided_slice %20 {offsets = [0, 96], sizes = [8, 32], strides = [1, 1]} : vector<8x128xf32> to vector<8x32xf32>
    %cst_26 = arith.constant 0.000000e+00 : f32
    %40 = vector.broadcast %cst_26 : f32 to vector<8x32xf32>
    %41 = arith.subf %40, %39 : vector<8x32xf32>
    %42 = math.exp %41 : vector<8x32xf32>
    %cst_27 = arith.constant 1.000000e+00 : f32
    %43 = vector.broadcast %cst_27 : f32 to vector<8x32xf32>
    %44 = arith.addf %43, %42 : vector<8x32xf32>
    %cst_28 = arith.constant 1.000000e+00 : f32
    %45 = vector.broadcast %cst_28 : f32 to vector<8x32xf32>
    %46 = arith.divf %45, %44 : vector<8x32xf32>
    %47 = arith.mulf %36, %15 : vector<8x32xf32>
    %48 = arith.mulf %28, %38 : vector<8x32xf32>
    %49 = arith.addf %47, %48 : vector<8x32xf32>
    %50 = math.tanh %49 : vector<8x32xf32>
    %51 = arith.mulf %46, %50 : vector<8x32xf32>
    %52 = vector.shape_cast %51 : vector<8x32xf32> to vector<8x1x32xf32>
    %c0_29 = arith.constant 0 : index
    %53 = arith.index_cast %c0_i32_16 : i32 to index
    %c0_30 = arith.constant 0 : index
    %54 = vector.load %arg6[%c0_29, %53, %c0_30] : memref<8x8x32xf32, #tpu.memory_space<vmem>>, vector<8x1x32xf32>
    tpu.vector_store %arg6[%c0_29, %53, %c0_30], %52 {strides = array<i32>} : memref<8x8x32xf32, #tpu.memory_space<vmem>>, vector<8x1x32xf32>,
    %c1_i32 = arith.constant 1 : i32
    %55 = arith.index_cast %c1_i32 : i32 to index
    %c0_31 = arith.constant 0 : index
    %c0_32 = arith.constant 0 : index
    %56 = vector.load %arg9[%55, %c0_31, %c0_32] : memref<8x8x128xf32, #tpu.memory_space<vmem>>, vector<1x8x128xf32>
    %57 = vector.shape_cast %56 : vector<1x8x128xf32> to vector<8x128xf32>
    %cst_33 = arith.constant dense<0.000000e+00> : vector<8x128xf32>
    %58 = tpu.matmul %51, %4, %cst_33 {dimension_numbers = #tpu.dot_dimension_numbers<[1], [0], [0], [1], [0, 0, 1, 1], [], []>} : vector<8x32xf32>, vector<32x128xf32>, vector<8x128xf32> -> vector<8x128xf32>
    %59 = arith.addf %57, %58 : vector<8x128xf32>
    %60 = vector.extract_strided_slice %59 {offsets = [0, 0], sizes = [8, 32], strides = [1, 1]} : vector<8x128xf32> to vector<8x32xf32>
    %cst_34 = arith.constant 0.000000e+00 : f32
    %61 = vector.broadcast %cst_34 : f32 to vector<8x32xf32>
    %62 = arith.subf %61, %60 : vector<8x32xf32>
    %63 = math.exp %62 : vector<8x32xf32>
    %cst_35 = arith.constant 1.000000e+00 : f32
    %64 = vector.broadcast %cst_35 : f32 to vector<8x32xf32>
    %65 = arith.addf %64, %63 : vector<8x32xf32>
    %cst_36 = arith.constant 1.000000e+00 : f32
    %66 = vector.broadcast %cst_36 : f32 to vector<8x32xf32>
    %67 = arith.divf %66, %65 : vector<8x32xf32>
    %68 = vector.extract_strided_slice %59 {offsets = [0, 32], sizes = [8, 32], strides = [1, 1]} : vector<8x128xf32> to vector<8x32xf32>
    %cst_37 = arith.constant 0.000000e+00 : f32
    %69 = vector.broadcast %cst_37 : f32 to vector<8x32xf32>
    %70 = arith.subf %69, %68 : vector<8x32xf32>
    %71 = math.exp %70 : vector<8x32xf32>
    %cst_38 = arith.constant 1.000000e+00 : f32
    %72 = vector.broadcast %cst_38 : f32 to vector<8x32xf32>
    %73 = arith.addf %72, %71 : vector<8x32xf32>
    %cst_39 = arith.constant 1.000000e+00 : f32
    %74 = vector.broadcast %cst_39 : f32 to vector<8x32xf32>
    %75 = arith.divf %74, %73 : vector<8x32xf32>
    %76 = vector.extract_strided_slice %59 {offsets = [0, 64], sizes = [8, 32], strides = [1, 1]} : vector<8x128xf32> to vector<8x32xf32>
    %77 = math.tanh %76 : vector<8x32xf32>
    %78 = vector.extract_strided_slice %59 {offsets = [0, 96], sizes = [8, 32], strides = [1, 1]} : vector<8x128xf32> to vector<8x32xf32>
    %cst_40 = arith.constant 0.000000e+00 : f32
    %79 = vector.broadcast %cst_40 : f32 to vector<8x32xf32>
    %80 = arith.subf %79, %78 : vector<8x32xf32>
    %81 = math.exp %80 : vector<8x32xf32>
    %cst_41 = arith.constant 1.000000e+00 : f32
    %82 = vector.broadcast %cst_41 : f32 to vector<8x32xf32>
    %83 = arith.addf %82, %81 : vector<8x32xf32>
    %cst_42 = arith.constant 1.000000e+00 : f32
    %84 = vector.broadcast %cst_42 : f32 to vector<8x32xf32>
    %85 = arith.divf %84, %83 : vector<8x32xf32>
    %86 = arith.mulf %75, %49 : vector<8x32xf32>
    %87 = arith.mulf %67, %77 : vector<8x32xf32>
    %88 = arith.addf %86, %87 : vector<8x32xf32>
    %89 = math.tanh %88 : vector<8x32xf32>
    %90 = arith.mulf %85, %89 : vector<8x32xf32>
    %91 = vector.shape_cast %90 : vector<8x32xf32> to vector<8x1x32xf32>
    %c0_43 = arith.constant 0 : index
    %92 = arith.index_cast %c1_i32 : i32 to index
    %c0_44 = arith.constant 0 : index
    %93 = vector.load %arg6[%c0_43, %92, %c0_44] : memref<8x8x32xf32, #tpu.memory_space<vmem>>, vector<8x1x32xf32>
    tpu.vector_store %arg6[%c0_43, %92, %c0_44], %91 {strides = array<i32>} : memref<8x8x32xf32, #tpu.memory_space<vmem>>, vector<8x1x32xf32>,
    %c2_i32 = arith.constant 2 : i32
    %94 = arith.index_cast %c2_i32 : i32 to index
    %c0_45 = arith.constant 0 : index
    %c0_46 = arith.constant 0 : index
    %95 = vector.load %arg9[%94, %c0_45, %c0_46] : memref<8x8x128xf32, #tpu.memory_space<vmem>>, vector<1x8x128xf32>
    %96 = vector.shape_cast %95 : vector<1x8x128xf32> to vector<8x128xf32>
    %cst_47 = arith.constant dense<0.000000e+00> : vector<8x128xf32>
    %97 = tpu.matmul %90, %4, %cst_47 {dimension_numbers = #tpu.dot_dimension_numbers<[1], [0], [0], [1], [0, 0, 1, 1], [], []>} : vector<8x32xf32>, vector<32x128xf32>, vector<8x128xf32> -> vector<8x128xf32>
    %98 = arith.addf %96, %97 : vector<8x128xf32>
    %99 = vector.extract_strided_slice %98 {offsets = [0, 0], sizes = [8, 32], strides = [1, 1]} : vector<8x128xf32> to vector<8x32xf32>
    %cst_48 = arith.constant 0.000000e+00 : f32
    %100 = vector.broadcast %cst_48 : f32 to vector<8x32xf32>
    %101 = arith.subf %100, %99 : vector<8x32xf32>
    %102 = math.exp %101 : vector<8x32xf32>
    %cst_49 = arith.constant 1.000000e+00 : f32
    %103 = vector.broadcast %cst_49 : f32 to vector<8x32xf32>
    %104 = arith.addf %103, %102 : vector<8x32xf32>
    %cst_50 = arith.constant 1.000000e+00 : f32
    %105 = vector.broadcast %cst_50 : f32 to vector<8x32xf32>
    %106 = arith.divf %105, %104 : vector<8x32xf32>
    %107 = vector.extract_strided_slice %98 {offsets = [0, 32], sizes = [8, 32], strides = [1, 1]} : vector<8x128xf32> to vector<8x32xf32>
    %cst_51 = arith.constant 0.000000e+00 : f32
    %108 = vector.broadcast %cst_51 : f32 to vector<8x32xf32>
    %109 = arith.subf %108, %107 : vector<8x32xf32>
    %110 = math.exp %109 : vector<8x32xf32>
    %cst_52 = arith.constant 1.000000e+00 : f32
    %111 = vector.broadcast %cst_52 : f32 to vector<8x32xf32>
    %112 = arith.addf %111, %110 : vector<8x32xf32>
    %cst_53 = arith.constant 1.000000e+00 : f32
    %113 = vector.broadcast %cst_53 : f32 to vector<8x32xf32>
    %114 = arith.divf %113, %112 : vector<8x32xf32>
    %115 = vector.extract_strided_slice %98 {offsets = [0, 64], sizes = [8, 32], strides = [1, 1]} : vector<8x128xf32> to vector<8x32xf32>
    %116 = math.tanh %115 : vector<8x32xf32>
    %117 = vector.extract_strided_slice %98 {offsets = [0, 96], sizes = [8, 32], strides = [1, 1]} : vector<8x128xf32> to vector<8x32xf32>
    %cst_54 = arith.constant 0.000000e+00 : f32
    %118 = vector.broadcast %cst_54 : f32 to vector<8x32xf32>
    %119 = arith.subf %118, %117 : vector<8x32xf32>
    %120 = math.exp %119 : vector<8x32xf32>
    %cst_55 = arith.constant 1.000000e+00 : f32
    %121 = vector.broadcast %cst_55 : f32 to vector<8x32xf32>
    %122 = arith.addf %121, %120 : vector<8x32xf32>
    %cst_56 = arith.constant 1.000000e+00 : f32
    %123 = vector.broadcast %cst_56 : f32 to vector<8x32xf32>
    %124 = arith.divf %123, %122 : vector<8x32xf32>
    %125 = arith.mulf %114, %88 : vector<8x32xf32>
    %126 = arith.mulf %106, %116 : vector<8x32xf32>
    %127 = arith.addf %125, %126 : vector<8x32xf32>
    %128 = math.tanh %127 : vector<8x32xf32>
    %129 = arith.mulf %124, %128 : vector<8x32xf32>
    %130 = vector.shape_cast %129 : vector<8x32xf32> to vector<8x1x32xf32>
    %c0_57 = arith.constant 0 : index
    %131 = arith.index_cast %c2_i32 : i32 to index
    %c0_58 = arith.constant 0 : index
    %132 = vector.load %arg6[%c0_57, %131, %c0_58] : memref<8x8x32xf32, #tpu.memory_space<vmem>>, vector<8x1x32xf32>
    tpu.vector_store %arg6[%c0_57, %131, %c0_58], %130 {strides = array<i32>} : memref<8x8x32xf32, #tpu.memory_space<vmem>>, vector<8x1x32xf32>,
    %c3_i32 = arith.constant 3 : i32
    %133 = arith.index_cast %c3_i32 : i32 to index
    %c0_59 = arith.constant 0 : index
    %c0_60 = arith.constant 0 : index
    %134 = vector.load %arg9[%133, %c0_59, %c0_60] : memref<8x8x128xf32, #tpu.memory_space<vmem>>, vector<1x8x128xf32>
    %135 = vector.shape_cast %134 : vector<1x8x128xf32> to vector<8x128xf32>
    %cst_61 = arith.constant dense<0.000000e+00> : vector<8x128xf32>
    %136 = tpu.matmul %129, %4, %cst_61 {dimension_numbers = #tpu.dot_dimension_numbers<[1], [0], [0], [1], [0, 0, 1, 1], [], []>} : vector<8x32xf32>, vector<32x128xf32>, vector<8x128xf32> -> vector<8x128xf32>
    %137 = arith.addf %135, %136 : vector<8x128xf32>
    %138 = vector.extract_strided_slice %137 {offsets = [0, 0], sizes = [8, 32], strides = [1, 1]} : vector<8x128xf32> to vector<8x32xf32>
    %cst_62 = arith.constant 0.000000e+00 : f32
    %139 = vector.broadcast %cst_62 : f32 to vector<8x32xf32>
    %140 = arith.subf %139, %138 : vector<8x32xf32>
    %141 = math.exp %140 : vector<8x32xf32>
    %cst_63 = arith.constant 1.000000e+00 : f32
    %142 = vector.broadcast %cst_63 : f32 to vector<8x32xf32>
    %143 = arith.addf %142, %141 : vector<8x32xf32>
    %cst_64 = arith.constant 1.000000e+00 : f32
    %144 = vector.broadcast %cst_64 : f32 to vector<8x32xf32>
    %145 = arith.divf %144, %143 : vector<8x32xf32>
    %146 = vector.extract_strided_slice %137 {offsets = [0, 32], sizes = [8, 32], strides = [1, 1]} : vector<8x128xf32> to vector<8x32xf32>
    %cst_65 = arith.constant 0.000000e+00 : f32
    %147 = vector.broadcast %cst_65 : f32 to vector<8x32xf32>
    %148 = arith.subf %147, %146 : vector<8x32xf32>
    %149 = math.exp %148 : vector<8x32xf32>
    %cst_66 = arith.constant 1.000000e+00 : f32
    %150 = vector.broadcast %cst_66 : f32 to vector<8x32xf32>
    %151 = arith.addf %150, %149 : vector<8x32xf32>
    %cst_67 = arith.constant 1.000000e+00 : f32
    %152 = vector.broadcast %cst_67 : f32 to vector<8x32xf32>
    %153 = arith.divf %152, %151 : vector<8x32xf32>
    %154 = vector.extract_strided_slice %137 {offsets = [0, 64], sizes = [8, 32], strides = [1, 1]} : vector<8x128xf32> to vector<8x32xf32>
    %155 = math.tanh %154 : vector<8x32xf32>
    %156 = vector.extract_strided_slice %137 {offsets = [0, 96], sizes = [8, 32], strides = [1, 1]} : vector<8x128xf32> to vector<8x32xf32>
    %cst_68 = arith.constant 0.000000e+00 : f32
    %157 = vector.broadcast %cst_68 : f32 to vector<8x32xf32>
    %158 = arith.subf %157, %156 : vector<8x32xf32>
    %159 = math.exp %158 : vector<8x32xf32>
    %cst_69 = arith.constant 1.000000e+00 : f32
    %160 = vector.broadcast %cst_69 : f32 to vector<8x32xf32>
    %161 = arith.addf %160, %159 : vector<8x32xf32>
    %cst_70 = arith.constant 1.000000e+00 : f32
    %162 = vector.broadcast %cst_70 : f32 to vector<8x32xf32>
    %163 = arith.divf %162, %161 : vector<8x32xf32>
    %164 = arith.mulf %153, %127 : vector<8x32xf32>
    %165 = arith.mulf %145, %155 : vector<8x32xf32>
    %166 = arith.addf %164, %165 : vector<8x32xf32>
    %167 = math.tanh %166 : vector<8x32xf32>
    %168 = arith.mulf %163, %167 : vector<8x32xf32>
    %169 = vector.shape_cast %168 : vector<8x32xf32> to vector<8x1x32xf32>
    %c0_71 = arith.constant 0 : index
    %170 = arith.index_cast %c3_i32 : i32 to index
    %c0_72 = arith.constant 0 : index
    %171 = vector.load %arg6[%c0_71, %170, %c0_72] : memref<8x8x32xf32, #tpu.memory_space<vmem>>, vector<8x1x32xf32>
    tpu.vector_store %arg6[%c0_71, %170, %c0_72], %169 {strides = array<i32>} : memref<8x8x32xf32, #tpu.memory_space<vmem>>, vector<8x1x32xf32>,
    %c4_i32 = arith.constant 4 : i32
    %172 = arith.index_cast %c4_i32 : i32 to index
    %c0_73 = arith.constant 0 : index
    %c0_74 = arith.constant 0 : index
    %173 = vector.load %arg9[%172, %c0_73, %c0_74] : memref<8x8x128xf32, #tpu.memory_space<vmem>>, vector<1x8x128xf32>
    %174 = vector.shape_cast %173 : vector<1x8x128xf32> to vector<8x128xf32>
    %cst_75 = arith.constant dense<0.000000e+00> : vector<8x128xf32>
    %175 = tpu.matmul %168, %4, %cst_75 {dimension_numbers = #tpu.dot_dimension_numbers<[1], [0], [0], [1], [0, 0, 1, 1], [], []>} : vector<8x32xf32>, vector<32x128xf32>, vector<8x128xf32> -> vector<8x128xf32>
    %176 = arith.addf %174, %175 : vector<8x128xf32>
    %177 = vector.extract_strided_slice %176 {offsets = [0, 0], sizes = [8, 32], strides = [1, 1]} : vector<8x128xf32> to vector<8x32xf32>
    %cst_76 = arith.constant 0.000000e+00 : f32
    %178 = vector.broadcast %cst_76 : f32 to vector<8x32xf32>
    %179 = arith.subf %178, %177 : vector<8x32xf32>
    %180 = math.exp %179 : vector<8x32xf32>
    %cst_77 = arith.constant 1.000000e+00 : f32
    %181 = vector.broadcast %cst_77 : f32 to vector<8x32xf32>
    %182 = arith.addf %181, %180 : vector<8x32xf32>
    %cst_78 = arith.constant 1.000000e+00 : f32
    %183 = vector.broadcast %cst_78 : f32 to vector<8x32xf32>
    %184 = arith.divf %183, %182 : vector<8x32xf32>
    %185 = vector.extract_strided_slice %176 {offsets = [0, 32], sizes = [8, 32], strides = [1, 1]} : vector<8x128xf32> to vector<8x32xf32>
    %cst_79 = arith.constant 0.000000e+00 : f32
    %186 = vector.broadcast %cst_79 : f32 to vector<8x32xf32>
    %187 = arith.subf %186, %185 : vector<8x32xf32>
    %188 = math.exp %187 : vector<8x32xf32>
    %cst_80 = arith.constant 1.000000e+00 : f32
    %189 = vector.broadcast %cst_80 : f32 to vector<8x32xf32>
    %190 = arith.addf %189, %188 : vector<8x32xf32>
    %cst_81 = arith.constant 1.000000e+00 : f32
    %191 = vector.broadcast %cst_81 : f32 to vector<8x32xf32>
    %192 = arith.divf %191, %190 : vector<8x32xf32>
    %193 = vector.extract_strided_slice %176 {offsets = [0, 64], sizes = [8, 32], strides = [1, 1]} : vector<8x128xf32> to vector<8x32xf32>
    %194 = math.tanh %193 : vector<8x32xf32>
    %195 = vector.extract_strided_slice %176 {offsets = [0, 96], sizes = [8, 32], strides = [1, 1]} : vector<8x128xf32> to vector<8x32xf32>
    %cst_82 = arith.constant 0.000000e+00 : f32
    %196 = vector.broadcast %cst_82 : f32 to vector<8x32xf32>
    %197 = arith.subf %196, %195 : vector<8x32xf32>
    %198 = math.exp %197 : vector<8x32xf32>
    %cst_83 = arith.constant 1.000000e+00 : f32
    %199 = vector.broadcast %cst_83 : f32 to vector<8x32xf32>
    %200 = arith.addf %199, %198 : vector<8x32xf32>
    %cst_84 = arith.constant 1.000000e+00 : f32
    %201 = vector.broadcast %cst_84 : f32 to vector<8x32xf32>
    %202 = arith.divf %201, %200 : vector<8x32xf32>
    %203 = arith.mulf %192, %166 : vector<8x32xf32>
    %204 = arith.mulf %184, %194 : vector<8x32xf32>
    %205 = arith.addf %203, %204 : vector<8x32xf32>
    %206 = math.tanh %205 : vector<8x32xf32>
    %207 = arith.mulf %202, %206 : vector<8x32xf32>
    %208 = vector.shape_cast %207 : vector<8x32xf32> to vector<8x1x32xf32>
    %c0_85 = arith.constant 0 : index
    %209 = arith.index_cast %c4_i32 : i32 to index
    %c0_86 = arith.constant 0 : index
    %210 = vector.load %arg6[%c0_85, %209, %c0_86] : memref<8x8x32xf32, #tpu.memory_space<vmem>>, vector<8x1x32xf32>
    tpu.vector_store %arg6[%c0_85, %209, %c0_86], %208 {strides = array<i32>} : memref<8x8x32xf32, #tpu.memory_space<vmem>>, vector<8x1x32xf32>,
    %c5_i32 = arith.constant 5 : i32
    %211 = arith.index_cast %c5_i32 : i32 to index
    %c0_87 = arith.constant 0 : index
    %c0_88 = arith.constant 0 : index
    %212 = vector.load %arg9[%211, %c0_87, %c0_88] : memref<8x8x128xf32, #tpu.memory_space<vmem>>, vector<1x8x128xf32>
    %213 = vector.shape_cast %212 : vector<1x8x128xf32> to vector<8x128xf32>
    %cst_89 = arith.constant dense<0.000000e+00> : vector<8x128xf32>
    %214 = tpu.matmul %207, %4, %cst_89 {dimension_numbers = #tpu.dot_dimension_numbers<[1], [0], [0], [1], [0, 0, 1, 1], [], []>} : vector<8x32xf32>, vector<32x128xf32>, vector<8x128xf32> -> vector<8x128xf32>
    %215 = arith.addf %213, %214 : vector<8x128xf32>
    %216 = vector.extract_strided_slice %215 {offsets = [0, 0], sizes = [8, 32], strides = [1, 1]} : vector<8x128xf32> to vector<8x32xf32>
    %cst_90 = arith.constant 0.000000e+00 : f32
    %217 = vector.broadcast %cst_90 : f32 to vector<8x32xf32>
    %218 = arith.subf %217, %216 : vector<8x32xf32>
    %219 = math.exp %218 : vector<8x32xf32>
    %cst_91 = arith.constant 1.000000e+00 : f32
    %220 = vector.broadcast %cst_91 : f32 to vector<8x32xf32>
    %221 = arith.addf %220, %219 : vector<8x32xf32>
    %cst_92 = arith.constant 1.000000e+00 : f32
    %222 = vector.broadcast %cst_92 : f32 to vector<8x32xf32>
    %223 = arith.divf %222, %221 : vector<8x32xf32>
    %224 = vector.extract_strided_slice %215 {offsets = [0, 32], sizes = [8, 32], strides = [1, 1]} : vector<8x128xf32> to vector<8x32xf32>
    %cst_93 = arith.constant 0.000000e+00 : f32
    %225 = vector.broadcast %cst_93 : f32 to vector<8x32xf32>
    %226 = arith.subf %225, %224 : vector<8x32xf32>
    %227 = math.exp %226 : vector<8x32xf32>
    %cst_94 = arith.constant 1.000000e+00 : f32
    %228 = vector.broadcast %cst_94 : f32 to vector<8x32xf32>
    %229 = arith.addf %228, %227 : vector<8x32xf32>
    %cst_95 = arith.constant 1.000000e+00 : f32
    %230 = vector.broadcast %cst_95 : f32 to vector<8x32xf32>
    %231 = arith.divf %230, %229 : vector<8x32xf32>
    %232 = vector.extract_strided_slice %215 {offsets = [0, 64], sizes = [8, 32], strides = [1, 1]} : vector<8x128xf32> to vector<8x32xf32>
    %233 = math.tanh %232 : vector<8x32xf32>
    %234 = vector.extract_strided_slice %215 {offsets = [0, 96], sizes = [8, 32], strides = [1, 1]} : vector<8x128xf32> to vector<8x32xf32>
    %cst_96 = arith.constant 0.000000e+00 : f32
    %235 = vector.broadcast %cst_96 : f32 to vector<8x32xf32>
    %236 = arith.subf %235, %234 : vector<8x32xf32>
    %237 = math.exp %236 : vector<8x32xf32>
    %cst_97 = arith.constant 1.000000e+00 : f32
    %238 = vector.broadcast %cst_97 : f32 to vector<8x32xf32>
    %239 = arith.addf %238, %237 : vector<8x32xf32>
    %cst_98 = arith.constant 1.000000e+00 : f32
    %240 = vector.broadcast %cst_98 : f32 to vector<8x32xf32>
    %241 = arith.divf %240, %239 : vector<8x32xf32>
    %242 = arith.mulf %231, %205 : vector<8x32xf32>
    %243 = arith.mulf %223, %233 : vector<8x32xf32>
    %244 = arith.addf %242, %243 : vector<8x32xf32>
    %245 = math.tanh %244 : vector<8x32xf32>
    %246 = arith.mulf %241, %245 : vector<8x32xf32>
    %247 = vector.shape_cast %246 : vector<8x32xf32> to vector<8x1x32xf32>
    %c0_99 = arith.constant 0 : index
    %248 = arith.index_cast %c5_i32 : i32 to index
    %c0_100 = arith.constant 0 : index
    %249 = vector.load %arg6[%c0_99, %248, %c0_100] : memref<8x8x32xf32, #tpu.memory_space<vmem>>, vector<8x1x32xf32>
    tpu.vector_store %arg6[%c0_99, %248, %c0_100], %247 {strides = array<i32>} : memref<8x8x32xf32, #tpu.memory_space<vmem>>, vector<8x1x32xf32>,
    %c6_i32 = arith.constant 6 : i32
    %250 = arith.index_cast %c6_i32 : i32 to index
    %c0_101 = arith.constant 0 : index
    %c0_102 = arith.constant 0 : index
    %251 = vector.load %arg9[%250, %c0_101, %c0_102] : memref<8x8x128xf32, #tpu.memory_space<vmem>>, vector<1x8x128xf32>
    %252 = vector.shape_cast %251 : vector<1x8x128xf32> to vector<8x128xf32>
    %cst_103 = arith.constant dense<0.000000e+00> : vector<8x128xf32>
    %253 = tpu.matmul %246, %4, %cst_103 {dimension_numbers = #tpu.dot_dimension_numbers<[1], [0], [0], [1], [0, 0, 1, 1], [], []>} : vector<8x32xf32>, vector<32x128xf32>, vector<8x128xf32> -> vector<8x128xf32>
    %254 = arith.addf %252, %253 : vector<8x128xf32>
    %255 = vector.extract_strided_slice %254 {offsets = [0, 0], sizes = [8, 32], strides = [1, 1]} : vector<8x128xf32> to vector<8x32xf32>
    %cst_104 = arith.constant 0.000000e+00 : f32
    %256 = vector.broadcast %cst_104 : f32 to vector<8x32xf32>
    %257 = arith.subf %256, %255 : vector<8x32xf32>
    %258 = math.exp %257 : vector<8x32xf32>
    %cst_105 = arith.constant 1.000000e+00 : f32
    %259 = vector.broadcast %cst_105 : f32 to vector<8x32xf32>
    %260 = arith.addf %259, %258 : vector<8x32xf32>
    %cst_106 = arith.constant 1.000000e+00 : f32
    %261 = vector.broadcast %cst_106 : f32 to vector<8x32xf32>
    %262 = arith.divf %261, %260 : vector<8x32xf32>
    %263 = vector.extract_strided_slice %254 {offsets = [0, 32], sizes = [8, 32], strides = [1, 1]} : vector<8x128xf32> to vector<8x32xf32>
    %cst_107 = arith.constant 0.000000e+00 : f32
    %264 = vector.broadcast %cst_107 : f32 to vector<8x32xf32>
    %265 = arith.subf %264, %263 : vector<8x32xf32>
    %266 = math.exp %265 : vector<8x32xf32>
    %cst_108 = arith.constant 1.000000e+00 : f32
    %267 = vector.broadcast %cst_108 : f32 to vector<8x32xf32>
    %268 = arith.addf %267, %266 : vector<8x32xf32>
    %cst_109 = arith.constant 1.000000e+00 : f32
    %269 = vector.broadcast %cst_109 : f32 to vector<8x32xf32>
    %270 = arith.divf %269, %268 : vector<8x32xf32>
    %271 = vector.extract_strided_slice %254 {offsets = [0, 64], sizes = [8, 32], strides = [1, 1]} : vector<8x128xf32> to vector<8x32xf32>
    %272 = math.tanh %271 : vector<8x32xf32>
    %273 = vector.extract_strided_slice %254 {offsets = [0, 96], sizes = [8, 32], strides = [1, 1]} : vector<8x128xf32> to vector<8x32xf32>
    %cst_110 = arith.constant 0.000000e+00 : f32
    %274 = vector.broadcast %cst_110 : f32 to vector<8x32xf32>
    %275 = arith.subf %274, %273 : vector<8x32xf32>
    %276 = math.exp %275 : vector<8x32xf32>
    %cst_111 = arith.constant 1.000000e+00 : f32
    %277 = vector.broadcast %cst_111 : f32 to vector<8x32xf32>
    %278 = arith.addf %277, %276 : vector<8x32xf32>
    %cst_112 = arith.constant 1.000000e+00 : f32
    %279 = vector.broadcast %cst_112 : f32 to vector<8x32xf32>
    %280 = arith.divf %279, %278 : vector<8x32xf32>
    %281 = arith.mulf %270, %244 : vector<8x32xf32>
    %282 = arith.mulf %262, %272 : vector<8x32xf32>
    %283 = arith.addf %281, %282 : vector<8x32xf32>
    %284 = math.tanh %283 : vector<8x32xf32>
    %285 = arith.mulf %280, %284 : vector<8x32xf32>
    %286 = vector.shape_cast %285 : vector<8x32xf32> to vector<8x1x32xf32>
    %c0_113 = arith.constant 0 : index
    %287 = arith.index_cast %c6_i32 : i32 to index
    %c0_114 = arith.constant 0 : index
    %288 = vector.load %arg6[%c0_113, %287, %c0_114] : memref<8x8x32xf32, #tpu.memory_space<vmem>>, vector<8x1x32xf32>
    tpu.vector_store %arg6[%c0_113, %287, %c0_114], %286 {strides = array<i32>} : memref<8x8x32xf32, #tpu.memory_space<vmem>>, vector<8x1x32xf32>,
    %c7_i32 = arith.constant 7 : i32
    %289 = arith.index_cast %c7_i32 : i32 to index
    %c0_115 = arith.constant 0 : index
    %c0_116 = arith.constant 0 : index
    %290 = vector.load %arg9[%289, %c0_115, %c0_116] : memref<8x8x128xf32, #tpu.memory_space<vmem>>, vector<1x8x128xf32>
    %291 = vector.shape_cast %290 : vector<1x8x128xf32> to vector<8x128xf32>
    %cst_117 = arith.constant dense<0.000000e+00> : vector<8x128xf32>
    %292 = tpu.matmul %285, %4, %cst_117 {dimension_numbers = #tpu.dot_dimension_numbers<[1], [0], [0], [1], [0, 0, 1, 1], [], []>} : vector<8x32xf32>, vector<32x128xf32>, vector<8x128xf32> -> vector<8x128xf32>
    %293 = arith.addf %291, %292 : vector<8x128xf32>
    %294 = vector.extract_strided_slice %293 {offsets = [0, 0], sizes = [8, 32], strides = [1, 1]} : vector<8x128xf32> to vector<8x32xf32>
    %cst_118 = arith.constant 0.000000e+00 : f32
    %295 = vector.broadcast %cst_118 : f32 to vector<8x32xf32>
    %296 = arith.subf %295, %294 : vector<8x32xf32>
    %297 = math.exp %296 : vector<8x32xf32>
    %cst_119 = arith.constant 1.000000e+00 : f32
    %298 = vector.broadcast %cst_119 : f32 to vector<8x32xf32>
    %299 = arith.addf %298, %297 : vector<8x32xf32>
    %cst_120 = arith.constant 1.000000e+00 : f32
    %300 = vector.broadcast %cst_120 : f32 to vector<8x32xf32>
    %301 = arith.divf %300, %299 : vector<8x32xf32>
    %302 = vector.extract_strided_slice %293 {offsets = [0, 32], sizes = [8, 32], strides = [1, 1]} : vector<8x128xf32> to vector<8x32xf32>
    %cst_121 = arith.constant 0.000000e+00 : f32
    %303 = vector.broadcast %cst_121 : f32 to vector<8x32xf32>
    %304 = arith.subf %303, %302 : vector<8x32xf32>
    %305 = math.exp %304 : vector<8x32xf32>
    %cst_122 = arith.constant 1.000000e+00 : f32
    %306 = vector.broadcast %cst_122 : f32 to vector<8x32xf32>
    %307 = arith.addf %306, %305 : vector<8x32xf32>
    %cst_123 = arith.constant 1.000000e+00 : f32
    %308 = vector.broadcast %cst_123 : f32 to vector<8x32xf32>
    %309 = arith.divf %308, %307 : vector<8x32xf32>
    %310 = vector.extract_strided_slice %293 {offsets = [0, 64], sizes = [8, 32], strides = [1, 1]} : vector<8x128xf32> to vector<8x32xf32>
    %311 = math.tanh %310 : vector<8x32xf32>
    %312 = vector.extract_strided_slice %293 {offsets = [0, 96], sizes = [8, 32], strides = [1, 1]} : vector<8x128xf32> to vector<8x32xf32>
    %cst_124 = arith.constant 0.000000e+00 : f32
    %313 = vector.broadcast %cst_124 : f32 to vector<8x32xf32>
    %314 = arith.subf %313, %312 : vector<8x32xf32>
    %315 = math.exp %314 : vector<8x32xf32>
    %cst_125 = arith.constant 1.000000e+00 : f32
    %316 = vector.broadcast %cst_125 : f32 to vector<8x32xf32>
    %317 = arith.addf %316, %315 : vector<8x32xf32>
    %cst_126 = arith.constant 1.000000e+00 : f32
    %318 = vector.broadcast %cst_126 : f32 to vector<8x32xf32>
    %319 = arith.divf %318, %317 : vector<8x32xf32>
    %320 = arith.mulf %309, %283 : vector<8x32xf32>
    %321 = arith.mulf %301, %311 : vector<8x32xf32>
    %322 = arith.addf %320, %321 : vector<8x32xf32>
    %323 = math.tanh %322 : vector<8x32xf32>
    %324 = arith.mulf %319, %323 : vector<8x32xf32>
    %325 = vector.shape_cast %324 : vector<8x32xf32> to vector<8x1x32xf32>
    %c0_127 = arith.constant 0 : index
    %326 = arith.index_cast %c7_i32 : i32 to index
    %c0_128 = arith.constant 0 : index
    %327 = vector.load %arg6[%c0_127, %326, %c0_128] : memref<8x8x32xf32, #tpu.memory_space<vmem>>, vector<8x1x32xf32>
    tpu.vector_store %arg6[%c0_127, %326, %c0_128], %325 {strides = array<i32>} : memref<8x8x32xf32, #tpu.memory_space<vmem>>, vector<8x1x32xf32>,
    %c8_i32 = arith.constant 8 : i32
    %c0_129 = arith.constant 0 : index
    %c0_130 = arith.constant 0 : index
    %328 = vector.load %arg7[%c0_129, %c0_130] : memref<8x32xf32, #tpu.memory_space<vmem>>, vector<8x32xf32>
    tpu.vector_store %arg7[%c0_129, %c0_130], %324 {strides = array<i32>} : memref<8x32xf32, #tpu.memory_space<vmem>>, vector<8x32xf32>,
    %c0_131 = arith.constant 0 : index
    %c0_132 = arith.constant 0 : index
    %329 = vector.load %arg8[%c0_131, %c0_132] : memref<8x32xf32, #tpu.memory_space<vmem>>, vector<8x32xf32>
    tpu.vector_store %arg8[%c0_131, %c0_132], %322 {strides = array<i32>} : memref<8x32xf32, #tpu.memory_space<vmem>>, vector<8x32xf32>,
    return
  }
  func.func @transform_0(%arg0: i32, %arg1: i32) -> (i32, i32, i32) {
    %c0_i32 = arith.constant 0 : i32
    %c0_i32_0 = arith.constant 0 : i32
    return %arg1, %arg0, %c0_i32 : i32, i32, i32
  }
  func.func @transform_1(%arg0: i32, %arg1: i32) -> (i32, i32) {
    %c0_i32 = arith.constant 0 : i32
    %c0_i32_0 = arith.constant 0 : i32
    %c0_i32_1 = arith.constant 0 : i32
    return %c0_i32, %c0_i32_0 : i32, i32
  }
  func.func @transform_2(%arg0: i32, %arg1: i32) -> (i32, i32) {
    %c0_i32 = arith.constant 0 : i32
    %c0_i32_0 = arith.constant 0 : i32
    %c0_i32_1 = arith.constant 0 : i32
    return %c0_i32, %c0_i32_0 : i32, i32
  }
  func.func @transform_3(%arg0: i32, %arg1: i32) -> (i32, i32) {
    %c0_i32 = arith.constant 0 : i32
    %c0_i32_0 = arith.constant 0 : i32
    %c0_i32_1 = arith.constant 0 : i32
    return %c0_i32, %c0_i32_0 : i32, i32
  }
  func.func @transform_4(%arg0: i32, %arg1: i32) -> (i32, i32, i32) {
    %c0_i32 = arith.constant 0 : i32
    %c0_i32_0 = arith.constant 0 : i32
    return %arg0, %arg1, %c0_i32 : i32, i32, i32
  }
}

</mosaic_0001>

<llo_original>
// kernel: tpu_custom_call.1
$region0: #{tpu_custom_call.1}
  #allocation0 [shape = 'u32[]', space=smem, size = 0x4, offset = 0x4, fixed_abs, tag = 'smem constant byte address 0x4 - core index']
  #allocation1 [shape = 'u32[144,128]{1,0:T(1,128)}', space=vmem, size = 0x12000, scoped, tag = 'internal scratch']
  #allocation2 [shape = 'f32[8,32]{1,0:T(8,128)}', space=vmem, size = 0x1000, scoped, tag = 'scratch operand']
  #allocation3 [shape = 'f32[8,32]{1,0:T(8,128)}', space=vmem, size = 0x1000, scoped, tag = 'scratch operand']
  #allocation4 [shape = 'f32[8,8,128]{2,1,0:T(8,128)}', space=vmem, size = 0x8000, scoped, tag = 'scratch operand']
  %s0 = inlined_call_operand.hbm [shape: f32[16,8,16], index: 0, kind: input, shape index: {}]
  %s1 = inlined_call_operand.hbm [shape: f32[16,128], index: 1, kind: input, shape index: {}]
  %s2 = inlined_call_operand.hbm [shape: f32[32,128], index: 2, kind: input, shape index: {}]
  %s3 = inlined_call_operand.vmem [shape: f32[1,128], index: 3, kind: input, shape index: {}]
  %s4 = inlined_call_operand.hbm [shape: f32[8,16,32], index: 4, kind: output, shape index: {}]
  %s5 = sld [smem:[#allocation0]]
  $region65: #{tpu_custom_call.1} parent=0
    _
  %s7 = ssub.s32 1, %s5
  %s8 = scalar_select 0, %s7, %s5
  $region1: #{tpu_custom_call.1} parent=0
    #allocation5 [shape = 'u8[65536]{0}', space=vmem, size = 0x10000, scoped, tag = 'input window, operand 0']
    #allocation6 [shape = 's32[2]{0}', space=sflag, size = 0x8, scoped, tag = 'scoped memory for tpu_custom_call.1']
    #allocation7 [shape = 's32[2]{0}', space=sflag, size = 0x8, scoped, tag = 'scoped memory for tpu_custom_call.1']
    #allocation8 [shape = 'u8[8192]{0}', space=vmem, size = 0x2000, scoped, tag = 'input window, operand 1, single buffered']
    #allocation9 [shape = 's32[1]{0}', space=sflag, size = 0x4, scoped, tag = 'scoped memory for tpu_custom_call.1']
    #allocation10 [shape = 'u8[16384]{0}', space=vmem, size = 0x4000, scoped, tag = 'input window, operand 2, single buffered']
    #allocation11 [shape = 'u8[65536]{0}', space=vmem, size = 0x10000, scoped, tag = 'output window, operand 0']
    %9 = vsyncpa [#allocation6], 0
    %s10 = scalar_lea.sflag [#allocation6], 1
    %11 = vsyncpa %s10, 0
    %12 = vsyncpa [#allocation9], 0
    %13 = vsyncpa [#allocation7], 0
    %s14 = scalar_lea.sflag [#allocation7], 1
    %15 = vsyncpa %s14, 0
    loop: start=0, step=1, limit=4
    $region2: #{tpu_custom_call.1} parent=1 // loop_pre_header
      _
    $region3: #{tpu_custom_call.1} parent=1 // loop_header
      %s17 = sphi 0, %s21
      %p18 = scmp.ge.s32.totalorder %s17, 4
      %s24 = sphi 0, %s36
      %s25 = sphi 0, %s32
      %s26 = sphi 0, %s24
      %s27 = sphi 0, %s25
      %s28 = sphi 0, %s26
      %s29 = sphi 0, %s27
      %s41 = sphi 0, %s43
      %s44 = sphi 0, %s41
      %s45 = sphi 0, %s44
      %s61 = sphi 0, %s45
      %s65 = sphi 0, %s65
      %s67 = sphi 0, %s65
      %s68 = sphi 0, %s67
      %s82 = sphi 0, %s68
      %s86 = sphi 0, %s86
      %s88 = sphi 0, %s86
      %s89 = sphi 0, %s88
      %s103 = sphi 0, %s89
      %s107 = sphi 0, %s107
      %s109 = sphi 0, %s107
      %s110 = sphi 0, %s109
      %s124 = sphi 0, %s110
      %s132 = sphi 0, %s134
      %s135 = sphi 0, %s132
      %s136 = sphi 0, %s135
      %s152 = sphi 0, %s136
    $region4: #{tpu_custom_call.1} parent=1 // loop_header_branch
      %20 = sbr.rel (%p18) target = $region8
    $region5: #{tpu_custom_call.1} parent=1 // loop_body
      %s22 = ssub.s32 %s17, 1
      %s23 = ssub.s32 %s17, 2
      %s30 = sadd.s32 1, %s25
      %p31 = scmp.ge.s32.totalorder %s30, 2
      %s32 = scalar_select %p31, 0, %s30
      %s33 = sadd.s32 1, %s24
      %s34 = scalar_select %p31, %s33, %s24
      %p35 = scmp.ge.s32.totalorder %s34, 1
      %s36 = scalar_select %p35, 0, %s34
      %s37 = ssub.s32 %s25, %s32
      %s38 = ssub.s32 %s24, %s36
      %s39 = sor.u32 %s37, %s38
      %p40 = scmp.eq.s32.totalorder %s39, 0
      %s42 = sadd.s32 %s41, 1
      %s43 = scalar_select %p40, %s41, %s42
      %p46 = pneg %p40
      %p47 = scmp.eq.s32.totalorder %s17, 1
      %p48 = por %p46, %p47
      %p49 = scmp.ne.s32.totalorder %s41, %s44
      %p50 = scmp.eq.s32.totalorder %s17, 0
      %p51 = por %p49, %p50
      %p52 = scmp.ne.s32.totalorder %s41, %s44
      %p53 = scmp.eq.s32.totalorder %s22, 1
      %p54 = por %p52, %p53
      %p55 = scmp.ne.s32.totalorder %s44, %s45
      %p56 = scmp.eq.s32.totalorder %s22, 0
      %p57 = por %p55, %p56
      %p58 = scmp.ne.s32.totalorder %s44, %s45
      %p59 = scmp.eq.s32.totalorder %s23, 1
      %p60 = por %p58, %p59
      %p62 = scmp.ne.s32.totalorder %s45, %s61
      %p63 = scmp.eq.s32.totalorder %s23, 0
      %p64 = por %p62, %p63
      %s66 = sadd.s32 %s65, 1
      %p69 = scmp.eq.s32.totalorder %s17, 1
      %p70 = scmp.ne.s32.totalorder %s65, %s67
      %p71 = scmp.eq.s32.totalorder %s17, 0
      %p72 = por %p70, %p71
      %p73 = scmp.ne.s32.totalorder %s65, %s67
      %p74 = scmp.eq.s32.totalorder %s22, 1
      %p75 = por %p73, %p74
      %p76 = scmp.ne.s32.totalorder %s67, %s68
      %p77 = scmp.eq.s32.totalorder %s22, 0
      %p78 = por %p76, %p77
      %p79 = scmp.ne.s32.totalorder %s67, %s68
      %p80 = scmp.eq.s32.totalorder %s23, 1
      %p81 = por %p79, %p80
      %p83 = scmp.ne.s32.totalorder %s68, %s82
      %p84 = scmp.eq.s32.totalorder %s23, 0
      %p85 = por %p83, %p84
      %s87 = sadd.s32 %s86, 1
      %p90 = scmp.eq.s32.totalorder %s17, 1
      %p91 = scmp.ne.s32.totalorder %s86, %s88
      %p92 = scmp.eq.s32.totalorder %s17, 0
      %p93 = por %p91, %p92
      %p94 = scmp.ne.s32.totalorder %s86, %s88
      %p95 = scmp.eq.s32.totalorder %s22, 1
      %p96 = por %p94, %p95
      %p97 = scmp.ne.s32.totalorder %s88, %s89
      %p98 = scmp.eq.s32.totalorder %s22, 0
      %p99 = por %p97, %p98
      %p100 = scmp.ne.s32.totalorder %s88, %s89
      %p101 = scmp.eq.s32.totalorder %s23, 1
      %p102 = por %p100, %p101
      %p104 = scmp.ne.s32.totalorder %s89, %s103
      %p105 = scmp.eq.s32.totalorder %s23, 0
      %p106 = por %p104, %p105
      %s108 = sadd.s32 %s107, 1
      %p111 = scmp.eq.s32.totalorder %s17, 1
      %p112 = scmp.ne.s32.totalorder %s107, %s109
      %p113 = scmp.eq.s32.totalorder %s17, 0
      %p114 = por %p112, %p113
      %p115 = scmp.ne.s32.totalorder %s107, %s109
      %p116 = scmp.eq.s32.totalorder %s22, 1
      %p117 = por %p115, %p116
      %p118 = scmp.ne.s32.totalorder %s109, %s110
      %p119 = scmp.eq.s32.totalorder %s22, 0
      %p120 = por %p118, %p119
      %p121 = scmp.ne.s32.totalorder %s109, %s110
      %p122 = scmp.eq.s32.totalorder %s23, 1
      %p123 = por %p121, %p122
      %p125 = scmp.ne.s32.totalorder %s110, %s124
      %p126 = scmp.eq.s32.totalorder %s23, 0
      %p127 = por %p125, %p126
      %s128 = ssub.s32 %s24, %s36
      %s129 = ssub.s32 %s25, %s32
      %s130 = sor.u32 %s128, %s129
      %p131 = scmp.eq.s32.totalorder %s130, 0
      %s133 = sadd.s32 %s132, 1
      %s134 = scalar_select %p131, %s132, %s133
      %p137 = pneg %p131
      %p138 = scmp.eq.s32.totalorder %s17, 1
      %p139 = por %p137, %p138
      %p140 = scmp.ne.s32.totalorder %s132, %s135
      %p141 = scmp.eq.s32.totalorder %s17, 0
      %p142 = por %p140, %p141
      %p143 = scmp.ne.s32.totalorder %s132, %s135
      %p144 = scmp.eq.s32.totalorder %s22, 1
      %p145 = por %p143, %p144
      %p146 = scmp.ne.s32.totalorder %s135, %s136
      %p147 = scmp.eq.s32.totalorder %s22, 0
      %p148 = por %p146, %p147
      %p149 = scmp.ne.s32.totalorder %s135, %s136
      %p150 = scmp.eq.s32.totalorder %s23, 1
      %p151 = por %p149, %p150
      %p153 = scmp.ne.s32.totalorder %s136, %s152
      %p154 = scmp.eq.s32.totalorder %s23, 0
      %p155 = por %p153, %p154
      %p156 = scmp.le.s32.totalorder 1, %s17
      %p157 = scmp.lt.s32.totalorder %s17, 3
      %p158 = pnand %p156, %p157
      %p159 = pneg %p158
      // Predicated region
      $region9: #{tpu_custom_call.1} parent=5 // pred_check
        _
      $region10: #{tpu_custom_call.1} parent=5 // pred_check_branch
        %161 = sbr.rel (%p158) target = $region12
      $region11: #{tpu_custom_call.1} parent=5 // pred_region
        %s162 = ssub.s32 %s17, 1
        // Predicated region
        $region13: #{tpu_custom_call.1} parent=11 // pred_check
          %p163 = pneg %p78
        $region14: #{tpu_custom_call.1} parent=11 // pred_check_branch
          %165 = sbr.rel (%p163) target = $region16
        $region15: #{tpu_custom_call.1} parent=11 // pred_region
          %s167 = ssub.s32 256, 256
          %168 = vsyncadd [#allocation9], %s167
          %s169 = sshll.u32 [#allocation8], 4
          %s170 = int_to_ptr.vmem [resolvable:$true] %s169
          %175 = dma.hbm_to_vmem [thread:$0]  %s1, 256, %s170, [#allocation9], 128, 128, 8
        $region16: #{tpu_custom_call.1} parent=11 // pred_fallthru
          _
        // Predicated region
        $region17: #{tpu_custom_call.1} parent=11 // pred_check
          %p176 = pneg %p99
        $region18: #{tpu_custom_call.1} parent=11 // pred_check_branch
          %178 = sbr.rel (%p176) target = $region20
        $region19: #{tpu_custom_call.1} parent=11 // pred_region
          %s180 = ssub.s32 512, 512
          %181 = vsyncadd [#allocation9], %s180
          %s182 = sshll.u32 [#allocation10], 4
          %s183 = int_to_ptr.vmem [resolvable:$true] %s182
          %188 = dma.hbm_to_vmem [thread:$0]  %s2, 512, %s183, [#allocation9], 128, 128, 8
        $region20: #{tpu_custom_call.1} parent=11 // pred_fallthru
          _
        // Predicated region
        $region21: #{tpu_custom_call.1} parent=11 // pred_check
          %p189 = pneg %p120
        $region22: #{tpu_custom_call.1} parent=11 // pred_check_branch
          %191 = sbr.rel (%p189) target = $region24
        $region23: #{tpu_custom_call.1} parent=11 // pred_region
          _
        $region24: #{tpu_custom_call.1} parent=11 // pred_fallthru
          _
      $region12: #{tpu_custom_call.1} parent=5 // pred_fallthru
        _
      %p192 = scmp.lt.s32.totalorder %s17, 2
      // Predicated region
      $region25: #{tpu_custom_call.1} parent=5 // pred_check
        %p193 = pneg %p192
      $region26: #{tpu_custom_call.1} parent=5 // pred_check_branch
        %195 = sbr.rel (%p193) target = $region28
      $region27: #{tpu_custom_call.1} parent=5 // pred_region
        // Predicated region
        $region29: #{tpu_custom_call.1} parent=27 // pred_check
          %p196 = pneg %p51
        $region30: #{tpu_custom_call.1} parent=27 // pred_check_branch
          %198 = sbr.rel (%p196) target = $region32
        $region31: #{tpu_custom_call.1} parent=27 // pred_region
          %s199 = sand.u32 %s41, 1
          %s200 = scalar_lea.sflag [#allocation6], %s199
          %s201 = sand.u32 %s41, 1
          %s202 = smul.addr %s201, 64
          %s203 = scalar_lea.vmem [#allocation5], %s202
          %s204 = smul.u32 8, %s25
          %s206 = ssub.s32 1024, 1024
          %207 = vsyncadd %s200, %s206
          %s208 = sadd.s32 %s24, %s204
          %s209 = smul.addr %s208, 128
          %s210 = scalar_lea.hbm %s0, %s209
          %s211 = sshll.u32 %s203, 4
          %s212 = int_to_ptr.vmem [resolvable:$true] %s211
          %217 = dma.hbm_to_vmem [thread:$0]  %s210, 1024, %s212, %s200, 128, 128, 8
        $region32: #{tpu_custom_call.1} parent=27 // pred_fallthru
          _
      $region28: #{tpu_custom_call.1} parent=5 // pred_fallthru
        _
      %p218 = scmp.le.s32.totalorder 1, %s17
      %p219 = scmp.lt.s32.totalorder %s17, 3
      %p220 = pnand %p218, %p219
      %p221 = pneg %p220
      // Predicated region
      $region33: #{tpu_custom_call.1} parent=5 // pred_check
        _
      $region34: #{tpu_custom_call.1} parent=5 // pred_check_branch
        %223 = sbr.rel (%p220) target = $region36
      $region35: #{tpu_custom_call.1} parent=5 // pred_region
        %s224 = ssub.s32 %s17, 1
        %s225 = sand.u32 %s44, 1
        %s226 = scalar_lea.sflag [#allocation6], %s225
        %s227 = sand.u32 %s44, 1
        %s228 = smul.addr %s227, 64
        %s229 = scalar_lea.vmem [#allocation5], %s228
        // Predicated region
        $region37: #{tpu_custom_call.1} parent=35 // pred_check
          %p230 = pneg %p57
        $region38: #{tpu_custom_call.1} parent=35 // pred_check_branch
          %232 = sbr.rel (%p230) target = $region40
        $region39: #{tpu_custom_call.1} parent=35 // pred_region
          %233 = dma.done %s226, 1024
        $region40: #{tpu_custom_call.1} parent=35 // pred_fallthru
          _
        // Predicated region
        $region41: #{tpu_custom_call.1} parent=35 // pred_check
          %p234 = pneg %p78
        $region42: #{tpu_custom_call.1} parent=35 // pred_check_branch
          %236 = sbr.rel (%p234) target = $region44
        $region43: #{tpu_custom_call.1} parent=35 // pred_region
          %237 = dma.done [#allocation9], 256
        $region44: #{tpu_custom_call.1} parent=35 // pred_fallthru
          _
        // Predicated region
        $region45: #{tpu_custom_call.1} parent=35 // pred_check
          %p238 = pneg %p99
        $region46: #{tpu_custom_call.1} parent=35 // pred_check_branch
          %240 = sbr.rel (%p238) target = $region48
        $region47: #{tpu_custom_call.1} parent=35 // pred_region
          %241 = dma.done [#allocation9], 512
        $region48: #{tpu_custom_call.1} parent=35 // pred_fallthru
          _
        %s242 = sand.u32 %s44, 1
        %s243 = scalar_lea.sflag [#allocation6], %s242
        %s244 = sand.u32 %s44, 1
        %s245 = smul.addr %s244, 64
        %s246 = scalar_lea.vmem [#allocation5], %s245
        %p247 = pneg %p57
        %p248 = pneg %p54
        %p249 = pneg %p78
        %p250 = pneg %p75
        %p251 = pneg %p99
        %p252 = pneg %p96
        %p253 = pneg %p120
        %p254 = pneg %p117
        %p255 = pneg %p148
        %p256 = pneg %p145
        %s257 = sand.u32 %s135, 1
        %s258 = scalar_lea.sflag [#allocation7], %s257
        %s259 = sand.u32 %s135, 1
        %s260 = smul.addr %s259, 64
        %s261 = scalar_lea.vmem [#allocation11], %s260
        %s262 = smul.u32 8, %s27
        %s263 = smul.u32 8, %s26
        %p264 = scmp.eq.s32.totalorder %s27, 0
        // Predicated region
        $region49: #{tpu_custom_call.1} parent=35 // pred_check
          %p265 = pneg %p264
        $region50: #{tpu_custom_call.1} parent=35 // pred_check_branch
          %267 = sbr.rel (%p265) target = $region52
        $region51: #{tpu_custom_call.1} parent=35 // pred_region
          %vm268 = vcmask 261120
          %269 = vst.msk [vmem:[#allocation2] sm:$0xff] %vm268, 0.0
          %270 = vst.msk [vmem:[#allocation3] sm:$0xff] %vm268, 0.0
        $region52: #{tpu_custom_call.1} parent=35 // pred_fallthru
          _
        %v271 = vld [vmem:[#allocation8] sm:$0xff]
        %v272 = vld [vmem:[#allocation8 + $0x8] sm:$0xff]
        %v273 = vld [vmem:[#allocation10] sm:$0xff]
        %v274 = vld [vmem:[#allocation10 + $0x8] sm:$0xff]
        %v275 = vld [vmem:[#allocation10 + $0x10] sm:$0xff]
        %v276 = vld [vmem:[#allocation10 + $0x18] sm:$0xff]
        %v277 = vld [vmem:[%s3] sm:$0x1]
        %v278 = vld [vmem:[%s229] sm:$0xff]
        %v279 = vld [vmem:[%s229 + $0x8] sm:$0xff]
        %v280 = vld [vmem:[%s229 + $0x10] sm:$0xff]
        %v281 = vld [vmem:[%s229 + $0x18] sm:$0xff]
        %v282 = vld [vmem:[%s229 + $0x20] sm:$0xff]
        %v283 = vld [vmem:[%s229 + $0x28] sm:$0xff]
        %v284 = vld [vmem:[%s229 + $0x30] sm:$0xff]
        %v285 = vld [vmem:[%s229 + $0x38] sm:$0xff]
        %vm286 = vcmask 130048
        %v288 = vsel %vm286, %v278, 0
        %v291 = vsel %vm286, %v279, 0
        %v294 = vsel %vm286, %v280, 0
        %v297 = vsel %vm286, %v281, 0
        %v300 = vsel %vm286, %v282, 0
        %v303 = vsel %vm286, %v283, 0
        %v306 = vsel %vm286, %v284, 0
        %v309 = vsel %vm286, %v285, 0
        %311 = vmatprep.subr.mxu0 0.0
        %312 = vmatpush1.msra.mxu0 %v271
        %313 = vmatprep.subr.mxu0 0.0
        %314 = vmatpush1.msra.mxu0 %v272
        %315 = vmatprep.subr.mxu0 0.0
        %316 = vmatpush1.msra.mxu0 0.0
        %317 = vmatprep.subr.mxu0 0.0
        %318 = vmatpush1.msra.mxu0 0.0
        %319 = vmatprep.subr.mxu0 0.0
        %320 = vmatpush1.msra.mxu0 0.0
        %321 = vmatprep.subr.mxu0 0.0
        %322 = vmatpush1.msra.mxu0 0.0
        %323 = vmatprep.subr.mxu0 0.0
        %324 = vmatpush1.msra.mxu0 0.0
        %325 = vmatprep.subr.mxu0 0.0
        %326 = vmatpush1.msra.mxu0 0.0
        %327 = vmatprep.subr.mxu0 0.0
        %328 = vmatpush1.msra.mxu0 0.0
        %329 = vmatprep.subr.mxu0 0.0
        %330 = vmatpush1.msra.mxu0 0.0
        %331 = vmatprep.subr.mxu0 0.0
        %332 = vmatpush1.msra.mxu0 0.0
        %333 = vmatprep.subr.mxu0 0.0
        %334 = vmatpush1.msra.mxu0 0.0
        %335 = vmatprep.subr.mxu0 0.0
        %336 = vmatpush1.msra.mxu0 0.0
        %337 = vmatprep.subr.mxu0 0.0
        %338 = vmatpush1.msra.mxu0 0.0
        %339 = vmatprep.subr.mxu0 0.0
        %340 = vmatpush1.msra.mxu0 0.0
        %341 = vmatprep.subr.mxu0 0.0
        %342 = vmatpush1.msra.mxu0 0.0
        %343 = vmatprep.subr.mxu0 0.0
        %344 = vmatpush1.msra.mxu0 0.0
        %345 = vmatprep.subr.mxu0 0.0
        %346 = vmatpush1.msra.mxu0 0.0
        %347 = vmatprep.subr.mxu0 0.0
        %348 = vmatpush1.msra.mxu0 0.0
        %349 = vmatprep.subr.mxu0 0.0
        %350 = vmatpush1.msra.mxu0 0.0
        %351 = vmatprep.subr.mxu0 0.0
        %352 = vmatpush1.msra.mxu0 0.0
        %353 = vmatprep.subr.mxu0 0.0
        %354 = vmatpush1.msra.mxu0 0.0
        %355 = vmatprep.subr.mxu0 0.0
        %356 = vmatpush1.msra.mxu0 0.0
        %357 = vmatprep.subr.mxu0 0.0
        %358 = vmatpush1.msra.mxu0 0.0
        %359 = vmatprep.subr.mxu0 0.0
        %360 = vmatpush1.msra.mxu0 0.0
        %361 = vmatprep.subr.mxu0 0.0
        %362 = vmatpush1.msra.mxu0 0.0
        %363 = vmatprep.subr.mxu0 0.0
        %364 = vmatpush1.msra.mxu0 0.0
        %365 = vmatprep.subr.mxu0 0.0
        %366 = vmatpush1.msra.mxu0 0.0
        %367 = vmatprep.subr.mxu0 0.0
        %368 = vmatpush1.msra.mxu0 0.0
        %369 = vmatprep.subr.mxu0 0.0
        %370 = vmatpush1.msra.mxu0 0.0
        %371 = vmatprep.subr.mxu0 0.0
        %372 = vmatpush1.msra.mxu0 0.0
        %373 = vmatprep.subr.mxu0 0.0
        %374 = vmatpush1.msra.mxu0 0.0
        %375 = vmatprep.mubr.f32.mxu0 0.0
        %376 = vmatmul.mubr.f32.gmra.mrb[0].mxu0 %v288
        %v377 = vpop.f32.mrb[0].mxu0
        %v378 = vadd.f32 0.0, %v377
        %v379 = vpop.f32.mrb[0].mxu0
        %380 = vmatprep.mubr.f32.mxu0 0.0
        %381 = vmatmul.mubr.f32.gmra.mrb[0].mxu0 %v291
        %v382 = vpop.f32.mrb[0].mxu0
        %v383 = vadd.f32 0.0, %v382
        %v384 = vpop.f32.mrb[0].mxu0
        %385 = vmatprep.mubr.f32.mxu0 0.0
        %386 = vmatmul.mubr.f32.gmra.mrb[0].mxu0 %v294
        %v387 = vpop.f32.mrb[0].mxu0
        %v388 = vadd.f32 0.0, %v387
        %v389 = vpop.f32.mrb[0].mxu0
        %390 = vmatprep.mubr.f32.mxu0 0.0
        %391 = vmatmul.mubr.f32.gmra.mrb[0].mxu0 %v297
        %v392 = vpop.f32.mrb[0].mxu0
        %v393 = vadd.f32 0.0, %v392
        %v394 = vpop.f32.mrb[0].mxu0
        %395 = vmatprep.mubr.f32.mxu0 0.0
        %396 = vmatmul.mubr.f32.gmra.mrb[0].mxu0 %v300
        %v397 = vpop.f32.mrb[0].mxu0
        %v398 = vadd.f32 0.0, %v397
        %v399 = vpop.f32.mrb[0].mxu0
        %400 = vmatprep.mubr.f32.mxu0 0.0
        %401 = vmatmul.mubr.f32.gmra.mrb[0].mxu0 %v303
        %v402 = vpop.f32.mrb[0].mxu0
        %v403 = vadd.f32 0.0, %v402
        %v404 = vpop.f32.mrb[0].mxu0
        %405 = vmatprep.mubr.f32.mxu0 0.0
        %406 = vmatmul.mubr.f32.gmra.mrb[0].mxu0 %v306
        %v407 = vpop.f32.mrb[0].mxu0
        %v408 = vadd.f32 0.0, %v407
        %v409 = vpop.f32.mrb[0].mxu0
        %410 = vmatprep.mubr.f32.mxu0 0.0
        %411 = vmatmul.mubr.f32.gmra.mrb[0].mxu0 %v309
        %v412 = vpop.f32.mrb[0].mxu0
        %v413 = vadd.f32 0.0, %v412
        %v414 = vpop.f32.mrb[0].mxu0
        %415 = vdwg.mxu0
        %v417 = vlaneseq
        %v418 = vshrl.u32 %v417, 7
        %v419 = vsub.s32 0, %v418
        %v420 = vrot.slane %v277, %v419
        %v422 = vadd.f32 %v378, %v420
        %v423 = vadd.f32 %v383, %v420
        %v424 = vadd.f32 %v388, %v420
        %v425 = vadd.f32 %v393, %v420
        %v426 = vadd.f32 %v398, %v420
        %v427 = vadd.f32 %v403, %v420
        %v428 = vadd.f32 %v408, %v420
        %v429 = vadd.f32 %v413, %v420
        %430 = vst [vmem:[#allocation4] sm:$0xff] %v422
        %431 = vst [vmem:[#allocation4 + $0x8] sm:$0xff] %v423
        %432 = vst [vmem:[#allocation4 + $0x10] sm:$0xff] %v424
        %433 = vst [vmem:[#allocation4 + $0x18] sm:$0xff] %v425
        %434 = vst [vmem:[#allocation4 + $0x20] sm:$0xff] %v426
        %435 = vst [vmem:[#allocation4 + $0x28] sm:$0xff] %v427
        %436 = vst [vmem:[#allocation4 + $0x30] sm:$0xff] %v428
        %437 = vst [vmem:[#allocation4 + $0x38] sm:$0xff] %v429
        %v438 = vld [vmem:[#allocation2] sm:$0xff]
        %v439 = vld [vmem:[#allocation3] sm:$0xff]
        %v440 = vld [vmem:[#allocation4] sm:$0xff]
        %vm441 = vcmask 261120
        %v443 = vsel %vm441, %v438, 0
        %445 = vmatprep.subr.mxu0 0.0
        %446 = vmatpush1.msra.mxu0 %v273
        %447 = vmatprep.subr.mxu0 0.0
        %448 = vmatpush1.msra.mxu0 %v274
        %449 = vmatprep.subr.mxu0 0.0
        %450 = vmatpush1.msra.mxu0 %v275
        %451 = vmatprep.subr.mxu0 0.0
        %452 = vmatpush1.msra.mxu0 %v276
        %453 = vmatprep.subr.mxu0 0.0
        %454 = vmatpush1.msra.mxu0 0.0
        %455 = vmatprep.subr.mxu0 0.0
        %456 = vmatpush1.msra.mxu0 0.0
        %457 = vmatprep.subr.mxu0 0.0
        %458 = vmatpush1.msra.mxu0 0.0
        %459 = vmatprep.subr.mxu0 0.0
        %460 = vmatpush1.msra.mxu0 0.0
        %461 = vmatprep.subr.mxu0 0.0
        %462 = vmatpush1.msra.mxu0 0.0
        %463 = vmatprep.subr.mxu0 0.0
        %464 = vmatpush1.msra.mxu0 0.0
        %465 = vmatprep.subr.mxu0 0.0
        %466 = vmatpush1.msra.mxu0 0.0
        %467 = vmatprep.subr.mxu0 0.0
        %468 = vmatpush1.msra.mxu0 0.0
        %469 = vmatprep.subr.mxu0 0.0
        %470 = vmatpush1.msra.mxu0 0.0
        %471 = vmatprep.subr.mxu0 0.0
        %472 = vmatpush1.msra.mxu0 0.0
        %473 = vmatprep.subr.mxu0 0.0
        %474 = vmatpush1.msra.mxu0 0.0
        %475 = vmatprep.subr.mxu0 0.0
        %476 = vmatpush1.msra.mxu0 0.0
        %477 = vmatprep.subr.mxu0 0.0
        %478 = vmatpush1.msra.mxu0 0.0
        %479 = vmatprep.subr.mxu0 0.0
        %480 = vmatpush1.msra.mxu0 0.0
        %481 = vmatprep.subr.mxu0 0.0
        %482 = vmatpush1.msra.mxu0 0.0
        %483 = vmatprep.subr.mxu0 0.0
        %484 = vmatpush1.msra.mxu0 0.0
        %485 = vmatprep.subr.mxu0 0.0
        %486 = vmatpush1.msra.mxu0 0.0
        %487 = vmatprep.subr.mxu0 0.0
        %488 = vmatpush1.msra.mxu0 0.0
        %489 = vmatprep.subr.mxu0 0.0
        %490 = vmatpush1.msra.mxu0 0.0
        %491 = vmatprep.subr.mxu0 0.0
        %492 = vmatpush1.msra.mxu0 0.0
        %493 = vmatprep.subr.mxu0 0.0
        %494 = vmatpush1.msra.mxu0 0.0
        %495 = vmatprep.subr.mxu0 0.0
        %496 = vmatpush1.msra.mxu0 0.0
        %497 = vmatprep.subr.mxu0 0.0
        %498 = vmatpush1.msra.mxu0 0.0
        %499 = vmatprep.subr.mxu0 0.0
        %500 = vmatpush1.msra.mxu0 0.0
        %501 = vmatprep.subr.mxu0 0.0
        %502 = vmatpush1.msra.mxu0 0.0
        %503 = vmatprep.subr.mxu0 0.0
        %504 = vmatpush1.msra.mxu0 0.0
        %505 = vmatprep.subr.mxu0 0.0
        %506 = vmatpush1.msra.mxu0 0.0
        %507 = vmatprep.subr.mxu0 0.0
        %508 = vmatpush1.msra.mxu0 0.0
        %509 = vmatprep.mubr.f32.mxu0 0.0
        %510 = vmatmul.mubr.f32.gmra.mrb[0].mxu0 %v443
        %v511 = vpop.f32.mrb[0].mxu0
        %v512 = vadd.f32 0.0, %v511
        %v513 = vpop.f32.mrb[0].mxu0
        %514 = vdwg.mxu0
        %v515 = vadd.f32 %v440, %v512
        %v516 = vsub.f32 0.0, %v515
        %v517 = vmul.f32 %v516, 1.442695
        %v518 = vpow.pop %v517
        %v519 = vadd.f32 %v518, 1.0
        %v520 = vrcp.pop %v519
        %v521 = vmul.f32 1.0, %v520
        %v522 = vtanh.pop %v515
        %524 = vrot.lane.b32.xlu0 %v439, 32
        %v525 = vpop.permute.xlu0 %524
        %v527 = vmul.f32 %v521, %v525
        %529 = vrot.lane.b32.xlu0 %v522, 64
        %v530 = vpop.permute.xlu0 %529
        %v532 = vmul.f32 %v521, %v530
        %534 = vrot.lane.b32.xlu0 %v532, 32
        %v535 = vpop.permute.xlu0 %534
        %v537 = vadd.f32 %v527, %v535
        %v538 = vtanh.pop %v537
        %540 = vrot.lane.b32.xlu0 %v538, 64
        %v541 = vpop.permute.xlu0 %540
        %v543 = vmul.f32 %v521, %v541
        %v545 = vcombine.high %v543, %v543
        %v547 = vunpack.c.l.s4 1966171168
        %v548 = vunpack.c.0.s8 %v547
        %v549 = vlaneseq
        %v550 = vshrl.u32 %v549, 7
        %v551 = vsub.s32 %v548, %v550
        %v552 = vrot.slane %v543, %v551
        %v554 = vunpack.c.l.s4 1966171168
        %v555 = vunpack.c.0.s8 %v554
        %v556 = vlaneseq
        %v557 = vshrl.u32 %v556, 7
        %v558 = vsub.s32 %v555, %v557
        %v559 = vrot.slane %v545, %v558
        %v560 = vcombine.high %v552, %v552
        %v561 = vcombine.high %v559, %v559
        %v563 = vunpack.c.l.s4 1966171168
        %v564 = vunpack.c.0.s8 %v563
        %v565 = vlaneseq
        %v566 = vshrl.u32 %v565, 7
        %v567 = vsub.s32 %v564, %v566
        %v568 = vrot.slane %v552, %v567
        %v570 = vunpack.c.l.s4 1966171168
        %v571 = vunpack.c.0.s8 %v570
        %v572 = vlaneseq
        %v573 = vshrl.u32 %v572, 7
        %v574 = vsub.s32 %v571, %v573
        %v575 = vrot.slane %v559, %v574
        %v577 = vunpack.c.l.s4 1966171168
        %v578 = vunpack.c.0.s8 %v577
        %v579 = vlaneseq
        %v580 = vshrl.u32 %v579, 7
        %v581 = vsub.s32 %v578, %v580
        %v582 = vrot.slane %v560, %v581
        %v584 = vunpack.c.l.s4 1966171168
        %v585 = vunpack.c.0.s8 %v584
        %v586 = vlaneseq
        %v587 = vshrl.u32 %v586, 7
        %v588 = vsub.s32 %v585, %v587
        %v589 = vrot.slane %v561, %v588
        %v590 = vcombine.high %v568, %v568
        %v591 = vcombine.high %v575, %v575
        %v592 = vcombine.high %v582, %v582
        %v593 = vcombine.high %v589, %v589
        %v594 = vlaneseq
        %v595 = vshrl.u32 %v594, 7
        %v596 = vsub.s32 0, %v595
        %v597 = vrot.slane %v568, %v596
        %v598 = vlaneseq
        %v599 = vshrl.u32 %v598, 7
        %v600 = vsub.s32 0, %v599
        %v601 = vrot.slane %v582, %v600
        %v602 = vlaneseq
        %v603 = vshrl.u32 %v602, 7
        %v604 = vsub.s32 0, %v603
        %v605 = vrot.slane %v590, %v604
        %v606 = vlaneseq
        %v607 = vshrl.u32 %v606, 7
        %v608 = vsub.s32 0, %v607
        %v609 = vrot.slane %v592, %v608
        %v610 = vlaneseq
        %v611 = vshrl.u32 %v610, 7
        %v612 = vsub.s32 0, %v611
        %v613 = vrot.slane %v575, %v612
        %v614 = vlaneseq
        %v615 = vshrl.u32 %v614, 7
        %v616 = vsub.s32 0, %v615
        %v617 = vrot.slane %v589, %v616
        %v618 = vlaneseq
        %v619 = vshrl.u32 %v618, 7
        %v620 = vsub.s32 0, %v619
        %v621 = vrot.slane %v591, %v620
        %v622 = vlaneseq
        %v623 = vshrl.u32 %v622, 7
        %v624 = vsub.s32 0, %v623
        %v625 = vrot.slane %v593, %v624
        %626 = vrot.lane.b32.xlu0 %v597, 32
        %v627 = vpop.permute.xlu0 %626
        %628 = vrot.lane.b32.xlu0 %v601, 32
        %v629 = vpop.permute.xlu0 %628
        %630 = vrot.lane.b32.xlu0 %v605, 32
        %v631 = vpop.permute.xlu0 %630
        %632 = vrot.lane.b32.xlu0 %v609, 32
        %v633 = vpop.permute.xlu0 %632
        %634 = vrot.lane.b32.xlu0 %v613, 32
        %v635 = vpop.permute.xlu0 %634
        %636 = vrot.lane.b32.xlu0 %v617, 32
        %v637 = vpop.permute.xlu0 %636
        %638 = vrot.lane.b32.xlu0 %v621, 32
        %v639 = vpop.permute.xlu0 %638
        %640 = vrot.lane.b32.xlu0 %v625, 32
        %v641 = vpop.permute.xlu0 %640
        %vm650 = vcmask 253952
        %651 = vst.msk [vmem:[%s261] sm:$0x1] %vm650, %v627
        %652 = vst.msk [vmem:[%s261 + $0x8] sm:$0x1] %vm650, %v629
        %653 = vst.msk [vmem:[%s261 + $0x10] sm:$0x1] %vm650, %v631
        %654 = vst.msk [vmem:[%s261 + $0x18] sm:$0x1] %vm650, %v633
        %655 = vst.msk [vmem:[%s261 + $0x20] sm:$0x1] %vm650, %v635
        %656 = vst.msk [vmem:[%s261 + $0x28] sm:$0x1] %vm650, %v637
        %657 = vst.msk [vmem:[%s261 + $0x30] sm:$0x1] %vm650, %v639
        %658 = vst.msk [vmem:[%s261 + $0x38] sm:$0x1] %vm650, %v641
        %s659 = scalar_lea.vmem [#allocation4], 8
        %v660 = vld [vmem:[%s659] sm:$0xff]
        %661 = vrot.lane.b32.xlu0 %v543, 32
        %v662 = vpop.permute.xlu0 %661
        %v663 = vsel %vm441, %v662, 0
        %665 = vmatprep.subr.mxu0 0.0
        %666 = vmatpush1.msra.mxu0 %v273
        %667 = vmatprep.subr.mxu0 0.0
        %668 = vmatpush1.msra.mxu0 %v274
        %669 = vmatprep.subr.mxu0 0.0
        %670 = vmatpush1.msra.mxu0 %v275
        %671 = vmatprep.subr.mxu0 0.0
        %672 = vmatpush1.msra.mxu0 %v276
        %673 = vmatprep.subr.mxu0 0.0
        %674 = vmatpush1.msra.mxu0 0.0
        %675 = vmatprep.subr.mxu0 0.0
        %676 = vmatpush1.msra.mxu0 0.0
        %677 = vmatprep.subr.mxu0 0.0
        %678 = vmatpush1.msra.mxu0 0.0
        %679 = vmatprep.subr.mxu0 0.0
        %680 = vmatpush1.msra.mxu0 0.0
        %681 = vmatprep.subr.mxu0 0.0
        %682 = vmatpush1.msra.mxu0 0.0
        %683 = vmatprep.subr.mxu0 0.0
        %684 = vmatpush1.msra.mxu0 0.0
        %685 = vmatprep.subr.mxu0 0.0
        %686 = vmatpush1.msra.mxu0 0.0
        %687 = vmatprep.subr.mxu0 0.0
        %688 = vmatpush1.msra.mxu0 0.0
        %689 = vmatprep.subr.mxu0 0.0
        %690 = vmatpush1.msra.mxu0 0.0
        %691 = vmatprep.subr.mxu0 0.0
        %692 = vmatpush1.msra.mxu0 0.0
        %693 = vmatprep.subr.mxu0 0.0
        %694 = vmatpush1.msra.mxu0 0.0
        %695 = vmatprep.subr.mxu0 0.0
        %696 = vmatpush1.msra.mxu0 0.0
        %697 = vmatprep.subr.mxu0 0.0
        %698 = vmatpush1.msra.mxu0 0.0
        %699 = vmatprep.subr.mxu0 0.0
        %700 = vmatpush1.msra.mxu0 0.0
        %701 = vmatprep.subr.mxu0 0.0
        %702 = vmatpush1.msra.mxu0 0.0
        %703 = vmatprep.subr.mxu0 0.0
        %704 = vmatpush1.msra.mxu0 0.0
        %705 = vmatprep.subr.mxu0 0.0
        %706 = vmatpush1.msra.mxu0 0.0
        %707 = vmatprep.subr.mxu0 0.0
        %708 = vmatpush1.msra.mxu0 0.0
        %709 = vmatprep.subr.mxu0 0.0
        %710 = vmatpush1.msra.mxu0 0.0
        %711 = vmatprep.subr.mxu0 0.0
        %712 = vmatpush1.msra.mxu0 0.0
        %713 = vmatprep.subr.mxu0 0.0
        %714 = vmatpush1.msra.mxu0 0.0
        %715 = vmatprep.subr.mxu0 0.0
        %716 = vmatpush1.msra.mxu0 0.0
        %717 = vmatprep.subr.mxu0 0.0
        %718 = vmatpush1.msra.mxu0 0.0
        %719 = vmatprep.subr.mxu0 0.0
        %720 = vmatpush1.msra.mxu0 0.0
        %721 = vmatprep.subr.mxu0 0.0
        %722 = vmatpush1.msra.mxu0 0.0
        %723 = vmatprep.subr.mxu0 0.0
        %724 = vmatpush1.msra.mxu0 0.0
        %725 = vmatprep.subr.mxu0 0.0
        %726 = vmatpush1.msra.mxu0 0.0
        %727 = vmatprep.subr.mxu0 0.0
        %728 = vmatpush1.msra.mxu0 0.0
        %729 = vmatprep.mubr.f32.mxu0 0.0
        %730 = vmatmul.mubr.f32.gmra.mrb[0].mxu0 %v663
        %v731 = vpop.f32.mrb[0].mxu0
        %v732 = vadd.f32 0.0, %v731
        %v733 = vpop.f32.mrb[0].mxu0
        %734 = vdwg.mxu0
        %v735 = vadd.f32 %v660, %v732
        %v736 = vsub.f32 0.0, %v735
        %v737 = vmul.f32 %v736, 1.442695
        %v738 = vpow.pop %v737
        %v739 = vadd.f32 %v738, 1.0
        %v740 = vrcp.pop %v739
        %v741 = vmul.f32 1.0, %v740
        %v742 = vtanh.pop %v735
        %v743 = vmul.f32 %v741, %v537
        %745 = vrot.lane.b32.xlu0 %v742, 64
        %v746 = vpop.permute.xlu0 %745
        %v748 = vmul.f32 %v741, %v746
        %750 = vrot.lane.b32.xlu0 %v748, 32
        %v751 = vpop.permute.xlu0 %750
        %v753 = vadd.f32 %v743, %v751
        %v754 = vtanh.pop %v753
        %756 = vrot.lane.b32.xlu0 %v754, 64
        %v757 = vpop.permute.xlu0 %756
        %v759 = vmul.f32 %v741, %v757
        %v761 = vcombine.high %v759, %v759
        %v763 = vunpack.c.l.s4 1966171168
        %v764 = vunpack.c.0.s8 %v763
        %v765 = vlaneseq
        %v766 = vshrl.u32 %v765, 7
        %v767 = vsub.s32 %v764, %v766
        %v768 = vrot.slane %v759, %v767
        %v770 = vunpack.c.l.s4 1966171168
        %v771 = vunpack.c.0.s8 %v770
        %v772 = vlaneseq
        %v773 = vshrl.u32 %v772, 7
        %v774 = vsub.s32 %v771, %v773
        %v775 = vrot.slane %v761, %v774
        %v776 = vcombine.high %v768, %v768
        %v777 = vcombine.high %v775, %v775
        %v779 = vunpack.c.l.s4 1966171168
        %v780 = vunpack.c.0.s8 %v779
        %v781 = vlaneseq
        %v782 = vshrl.u32 %v781, 7
        %v783 = vsub.s32 %v780, %v782
        %v784 = vrot.slane %v768, %v783
        %v786 = vunpack.c.l.s4 1966171168
        %v787 = vunpack.c.0.s8 %v786
        %v788 = vlaneseq
        %v789 = vshrl.u32 %v788, 7
        %v790 = vsub.s32 %v787, %v789
        %v791 = vrot.slane %v775, %v790
        %v793 = vunpack.c.l.s4 1966171168
        %v794 = vunpack.c.0.s8 %v793
        %v795 = vlaneseq
        %v796 = vshrl.u32 %v795, 7
        %v797 = vsub.s32 %v794, %v796
        %v798 = vrot.slane %v776, %v797
        %v800 = vunpack.c.l.s4 1966171168
        %v801 = vunpack.c.0.s8 %v800
        %v802 = vlaneseq
        %v803 = vshrl.u32 %v802, 7
        %v804 = vsub.s32 %v801, %v803
        %v805 = vrot.slane %v777, %v804
        %v806 = vcombine.high %v784, %v784
        %v807 = vcombine.high %v791, %v791
        %v808 = vcombine.high %v798, %v798
        %v809 = vcombine.high %v805, %v805
        %v810 = vlaneseq
        %v811 = vshrl.u32 %v810, 7
        %v812 = vsub.s32 0, %v811
        %v813 = vrot.slane %v784, %v812
        %v814 = vlaneseq
        %v815 = vshrl.u32 %v814, 7
        %v816 = vsub.s32 0, %v815
        %v817 = vrot.slane %v798, %v816
        %v818 = vlaneseq
        %v819 = vshrl.u32 %v818, 7
        %v820 = vsub.s32 0, %v819
        %v821 = vrot.slane %v806, %v820
        %v822 = vlaneseq
        %v823 = vshrl.u32 %v822, 7
        %v824 = vsub.s32 0, %v823
        %v825 = vrot.slane %v808, %v824
        %v826 = vlaneseq
        %v827 = vshrl.u32 %v826, 7
        %v828 = vsub.s32 0, %v827
        %v829 = vrot.slane %v791, %v828
        %v830 = vlaneseq
        %v831 = vshrl.u32 %v830, 7
        %v832 = vsub.s32 0, %v831
        %v833 = vrot.slane %v805, %v832
        %v834 = vlaneseq
        %v835 = vshrl.u32 %v834, 7
        %v836 = vsub.s32 0, %v835
        %v837 = vrot.slane %v807, %v836
        %v838 = vlaneseq
        %v839 = vshrl.u32 %v838, 7
        %v840 = vsub.s32 0, %v839
        %v841 = vrot.slane %v809, %v840
        %842 = vrot.lane.b32.xlu0 %v813, 32
        %v843 = vpop.permute.xlu0 %842
        %844 = vrot.lane.b32.xlu0 %v817, 32
        %v845 = vpop.permute.xlu0 %844
        %846 = vrot.lane.b32.xlu0 %v821, 32
        %v847 = vpop.permute.xlu0 %846
        %848 = vrot.lane.b32.xlu0 %v825, 32
        %v849 = vpop.permute.xlu0 %848
        %850 = vrot.lane.b32.xlu0 %v829, 32
        %v851 = vpop.permute.xlu0 %850
        %852 = vrot.lane.b32.xlu0 %v833, 32
        %v853 = vpop.permute.xlu0 %852
        %854 = vrot.lane.b32.xlu0 %v837, 32
        %v855 = vpop.permute.xlu0 %854
        %856 = vrot.lane.b32.xlu0 %v841, 32
        %v857 = vpop.permute.xlu0 %856
        %866 = vst.msk [vmem:[%s261 + $0x1] sm:$0x1] %vm650, %v843
        %867 = vst.msk [vmem:[%s261 + $0x9] sm:$0x1] %vm650, %v845
        %868 = vst.msk [vmem:[%s261 + $0x11] sm:$0x1] %vm650, %v847
        %869 = vst.msk [vmem:[%s261 + $0x19] sm:$0x1] %vm650, %v849
        %870 = vst.msk [vmem:[%s261 + $0x21] sm:$0x1] %vm650, %v851
        %871 = vst.msk [vmem:[%s261 + $0x29] sm:$0x1] %vm650, %v853
        %872 = vst.msk [vmem:[%s261 + $0x31] sm:$0x1] %vm650, %v855
        %873 = vst.msk [vmem:[%s261 + $0x39] sm:$0x1] %vm650, %v857
        %s874 = scalar_lea.vmem [#allocation4], 16
        %v875 = vld [vmem:[%s874] sm:$0xff]
        %876 = vrot.lane.b32.xlu0 %v759, 32
        %v877 = vpop.permute.xlu0 %876
        %v878 = vsel %vm441, %v877, 0
        %880 = vmatprep.subr.mxu0 0.0
        %881 = vmatpush1.msra.mxu0 %v273
        %882 = vmatprep.subr.mxu0 0.0
        %883 = vmatpush1.msra.mxu0 %v274
        %884 = vmatprep.subr.mxu0 0.0
        %885 = vmatpush1.msra.mxu0 %v275
        %886 = vmatprep.subr.mxu0 0.0
        %887 = vmatpush1.msra.mxu0 %v276
        %888 = vmatprep.subr.mxu0 0.0
        %889 = vmatpush1.msra.mxu0 0.0
        %890 = vmatprep.subr.mxu0 0.0
        %891 = vmatpush1.msra.mxu0 0.0
        %892 = vmatprep.subr.mxu0 0.0
        %893 = vmatpush1.msra.mxu0 0.0
        %894 = vmatprep.subr.mxu0 0.0
        %895 = vmatpush1.msra.mxu0 0.0
        %896 = vmatprep.subr.mxu0 0.0
        %897 = vmatpush1.msra.mxu0 0.0
        %898 = vmatprep.subr.mxu0 0.0
        %899 = vmatpush1.msra.mxu0 0.0
        %900 = vmatprep.subr.mxu0 0.0
        %901 = vmatpush1.msra.mxu0 0.0
        %902 = vmatprep.subr.mxu0 0.0
        %903 = vmatpush1.msra.mxu0 0.0
        %904 = vmatprep.subr.mxu0 0.0
        %905 = vmatpush1.msra.mxu0 0.0
        %906 = vmatprep.subr.mxu0 0.0
        %907 = vmatpush1.msra.mxu0 0.0
        %908 = vmatprep.subr.mxu0 0.0
        %909 = vmatpush1.msra.mxu0 0.0
        %910 = vmatprep.subr.mxu0 0.0
        %911 = vmatpush1.msra.mxu0 0.0
        %912 = vmatprep.subr.mxu0 0.0
        %913 = vmatpush1.msra.mxu0 0.0
        %914 = vmatprep.subr.mxu0 0.0
        %915 = vmatpush1.msra.mxu0 0.0
        %916 = vmatprep.subr.mxu0 0.0
        %917 = vmatpush1.msra.mxu0 0.0
        %918 = vmatprep.subr.mxu0 0.0
        %919 = vmatpush1.msra.mxu0 0.0
        %920 = vmatprep.subr.mxu0 0.0
        %921 = vmatpush1.msra.mxu0 0.0
        %922 = vmatprep.subr.mxu0 0.0
        %923 = vmatpush1.msra.mxu0 0.0
        %924 = vmatprep.subr.mxu0 0.0
        %925 = vmatpush1.msra.mxu0 0.0
        %926 = vmatprep.subr.mxu0 0.0
        %927 = vmatpush1.msra.mxu0 0.0
        %928 = vmatprep.subr.mxu0 0.0
        %929 = vmatpush1.msra.mxu0 0.0
        %930 = vmatprep.subr.mxu0 0.0
        %931 = vmatpush1.msra.mxu0 0.0
        %932 = vmatprep.subr.mxu0 0.0
        %933 = vmatpush1.msra.mxu0 0.0
        %934 = vmatprep.subr.mxu0 0.0
        %935 = vmatpush1.msra.mxu0 0.0
        %936 = vmatprep.subr.mxu0 0.0
        %937 = vmatpush1.msra.mxu0 0.0
        %938 = vmatprep.subr.mxu0 0.0
        %939 = vmatpush1.msra.mxu0 0.0
        %940 = vmatprep.subr.mxu0 0.0
        %941 = vmatpush1.msra.mxu0 0.0
        %942 = vmatprep.subr.mxu0 0.0
        %943 = vmatpush1.msra.mxu0 0.0
        %944 = vmatprep.mubr.f32.mxu0 0.0
        %945 = vmatmul.mubr.f32.gmra.mrb[0].mxu0 %v878
        %v946 = vpop.f32.mrb[0].mxu0
        %v947 = vadd.f32 0.0, %v946
        %v948 = vpop.f32.mrb[0].mxu0
        %949 = vdwg.mxu0
        %v950 = vadd.f32 %v875, %v947
        %v951 = vsub.f32 0.0, %v950
        %v952 = vmul.f32 %v951, 1.442695
        %v953 = vpow.pop %v952
        %v954 = vadd.f32 %v953, 1.0
        %v955 = vrcp.pop %v954
        %v956 = vmul.f32 1.0, %v955
        %v957 = vtanh.pop %v950
        %v958 = vmul.f32 %v956, %v753
        %960 = vrot.lane.b32.xlu0 %v957, 64
        %v961 = vpop.permute.xlu0 %960
        %v963 = vmul.f32 %v956, %v961
        %965 = vrot.lane.b32.xlu0 %v963, 32
        %v966 = vpop.permute.xlu0 %965
        %v968 = vadd.f32 %v958, %v966
        %v969 = vtanh.pop %v968
        %971 = vrot.lane.b32.xlu0 %v969, 64
        %v972 = vpop.permute.xlu0 %971
        %v974 = vmul.f32 %v956, %v972
        %v976 = vcombine.high %v974, %v974
        %v978 = vunpack.c.l.s4 1966171168
        %v979 = vunpack.c.0.s8 %v978
        %v980 = vlaneseq
        %v981 = vshrl.u32 %v980, 7
        %v982 = vsub.s32 %v979, %v981
        %v983 = vrot.slane %v974, %v982
        %v985 = vunpack.c.l.s4 1966171168
        %v986 = vunpack.c.0.s8 %v985
        %v987 = vlaneseq
        %v988 = vshrl.u32 %v987, 7
        %v989 = vsub.s32 %v986, %v988
        %v990 = vrot.slane %v976, %v989
        %v991 = vcombine.high %v983, %v983
        %v992 = vcombine.high %v990, %v990
        %v994 = vunpack.c.l.s4 1966171168
        %v995 = vunpack.c.0.s8 %v994
        %v996 = vlaneseq
        %v997 = vshrl.u32 %v996, 7
        %v998 = vsub.s32 %v995, %v997
        %v999 = vrot.slane %v983, %v998
        %v1001 = vunpack.c.l.s4 1966171168
        %v1002 = vunpack.c.0.s8 %v1001
        %v1003 = vlaneseq
        %v1004 = vshrl.u32 %v1003, 7
        %v1005 = vsub.s32 %v1002, %v1004
        %v1006 = vrot.slane %v990, %v1005
        %v1008 = vunpack.c.l.s4 1966171168
        %v1009 = vunpack.c.0.s8 %v1008
        %v1010 = vlaneseq
        %v1011 = vshrl.u32 %v1010, 7
        %v1012 = vsub.s32 %v1009, %v1011
        %v1013 = vrot.slane %v991, %v1012
        %v1015 = vunpack.c.l.s4 1966171168
        %v1016 = vunpack.c.0.s8 %v1015
        %v1017 = vlaneseq
        %v1018 = vshrl.u32 %v1017, 7
        %v1019 = vsub.s32 %v1016, %v1018
        %v1020 = vrot.slane %v992, %v1019
        %v1021 = vcombine.high %v999, %v999
        %v1022 = vcombine.high %v1006, %v1006
        %v1023 = vcombine.high %v1013, %v1013
        %v1024 = vcombine.high %v1020, %v1020
        %v1025 = vlaneseq
        %v1026 = vshrl.u32 %v1025, 7
        %v1027 = vsub.s32 0, %v1026
        %v1028 = vrot.slane %v999, %v1027
        %v1029 = vlaneseq
        %v1030 = vshrl.u32 %v1029, 7
        %v1031 = vsub.s32 0, %v1030
        %v1032 = vrot.slane %v1013, %v1031
        %v1033 = vlaneseq
        %v1034 = vshrl.u32 %v1033, 7
        %v1035 = vsub.s32 0, %v1034
        %v1036 = vrot.slane %v1021, %v1035
        %v1037 = vlaneseq
        %v1038 = vshrl.u32 %v1037, 7
        %v1039 = vsub.s32 0, %v1038
        %v1040 = vrot.slane %v1023, %v1039
        %v1041 = vlaneseq
        %v1042 = vshrl.u32 %v1041, 7
        %v1043 = vsub.s32 0, %v1042
        %v1044 = vrot.slane %v1006, %v1043
        %v1045 = vlaneseq
        %v1046 = vshrl.u32 %v1045, 7
        %v1047 = vsub.s32 0, %v1046
        %v1048 = vrot.slane %v1020, %v1047
        %v1049 = vlaneseq
        %v1050 = vshrl.u32 %v1049, 7
        %v1051 = vsub.s32 0, %v1050
        %v1052 = vrot.slane %v1022, %v1051
        %v1053 = vlaneseq
        %v1054 = vshrl.u32 %v1053, 7
        %v1055 = vsub.s32 0, %v1054
        %v1056 = vrot.slane %v1024, %v1055
        %1057 = vrot.lane.b32.xlu0 %v1028, 32
        %v1058 = vpop.permute.xlu0 %1057
        %1059 = vrot.lane.b32.xlu0 %v1032, 32
        %v1060 = vpop.permute.xlu0 %1059
        %1061 = vrot.lane.b32.xlu0 %v1036, 32
        %v1062 = vpop.permute.xlu0 %1061
        %1063 = vrot.lane.b32.xlu0 %v1040, 32
        %v1064 = vpop.permute.xlu0 %1063
        %1065 = vrot.lane.b32.xlu0 %v1044, 32
        %v1066 = vpop.permute.xlu0 %1065
        %1067 = vrot.lane.b32.xlu0 %v1048, 32
        %v1068 = vpop.permute.xlu0 %1067
        %1069 = vrot.lane.b32.xlu0 %v1052, 32
        %v1070 = vpop.permute.xlu0 %1069
        %1071 = vrot.lane.b32.xlu0 %v1056, 32
        %v1072 = vpop.permute.xlu0 %1071
        %1081 = vst.msk [vmem:[%s261 + $0x2] sm:$0x1] %vm650, %v1058
        %1082 = vst.msk [vmem:[%s261 + $0xa] sm:$0x1] %vm650, %v1060
        %1083 = vst.msk [vmem:[%s261 + $0x12] sm:$0x1] %vm650, %v1062
        %1084 = vst.msk [vmem:[%s261 + $0x1a] sm:$0x1] %vm650, %v1064
        %1085 = vst.msk [vmem:[%s261 + $0x22] sm:$0x1] %vm650, %v1066
        %1086 = vst.msk [vmem:[%s261 + $0x2a] sm:$0x1] %vm650, %v1068
        %1087 = vst.msk [vmem:[%s261 + $0x32] sm:$0x1] %vm650, %v1070
        %1088 = vst.msk [vmem:[%s261 + $0x3a] sm:$0x1] %vm650, %v1072
        %s1089 = scalar_lea.vmem [#allocation4], 24
        %v1090 = vld [vmem:[%s1089] sm:$0xff]
        %1091 = vrot.lane.b32.xlu0 %v974, 32
        %v1092 = vpop.permute.xlu0 %1091
        %v1093 = vsel %vm441, %v1092, 0
        %1095 = vmatprep.subr.mxu0 0.0
        %1096 = vmatpush1.msra.mxu0 %v273
        %1097 = vmatprep.subr.mxu0 0.0
        %1098 = vmatpush1.msra.mxu0 %v274
        %1099 = vmatprep.subr.mxu0 0.0
        %1100 = vmatpush1.msra.mxu0 %v275
        %1101 = vmatprep.subr.mxu0 0.0
        %1102 = vmatpush1.msra.mxu0 %v276
        %1103 = vmatprep.subr.mxu0 0.0
        %1104 = vmatpush1.msra.mxu0 0.0
        %1105 = vmatprep.subr.mxu0 0.0
        %1106 = vmatpush1.msra.mxu0 0.0
        %1107 = vmatprep.subr.mxu0 0.0
        %1108 = vmatpush1.msra.mxu0 0.0
        %1109 = vmatprep.subr.mxu0 0.0
        %1110 = vmatpush1.msra.mxu0 0.0
        %1111 = vmatprep.subr.mxu0 0.0
        %1112 = vmatpush1.msra.mxu0 0.0
        %1113 = vmatprep.subr.mxu0 0.0
        %1114 = vmatpush1.msra.mxu0 0.0
        %1115 = vmatprep.subr.mxu0 0.0
        %1116 = vmatpush1.msra.mxu0 0.0
        %1117 = vmatprep.subr.mxu0 0.0
        %1118 = vmatpush1.msra.mxu0 0.0
        %1119 = vmatprep.subr.mxu0 0.0
        %1120 = vmatpush1.msra.mxu0 0.0
        %1121 = vmatprep.subr.mxu0 0.0
        %1122 = vmatpush1.msra.mxu0 0.0
        %1123 = vmatprep.subr.mxu0 0.0
        %1124 = vmatpush1.msra.mxu0 0.0
        %1125 = vmatprep.subr.mxu0 0.0
        %1126 = vmatpush1.msra.mxu0 0.0
        %1127 = vmatprep.subr.mxu0 0.0
        %1128 = vmatpush1.msra.mxu0 0.0
        %1129 = vmatprep.subr.mxu0 0.0
        %1130 = vmatpush1.msra.mxu0 0.0
        %1131 = vmatprep.subr.mxu0 0.0
        %1132 = vmatpush1.msra.mxu0 0.0
        %1133 = vmatprep.subr.mxu0 0.0
        %1134 = vmatpush1.msra.mxu0 0.0
        %1135 = vmatprep.subr.mxu0 0.0
        %1136 = vmatpush1.msra.mxu0 0.0
        %1137 = vmatprep.subr.mxu0 0.0
        %1138 = vmatpush1.msra.mxu0 0.0
        %1139 = vmatprep.subr.mxu0 0.0
        %1140 = vmatpush1.msra.mxu0 0.0
        %1141 = vmatprep.subr.mxu0 0.0
        %1142 = vmatpush1.msra.mxu0 0.0
        %1143 = vmatprep.subr.mxu0 0.0
        %1144 = vmatpush1.msra.mxu0 0.0
        %1145 = vmatprep.subr.mxu0 0.0
        %1146 = vmatpush1.msra.mxu0 0.0
        %1147 = vmatprep.subr.mxu0 0.0
        %1148 = vmatpush1.msra.mxu0 0.0
        %1149 = vmatprep.subr.mxu0 0.0
        %1150 = vmatpush1.msra.mxu0 0.0
        %1151 = vmatprep.subr.mxu0 0.0
        %1152 = vmatpush1.msra.mxu0 0.0
        %1153 = vmatprep.subr.mxu0 0.0
        %1154 = vmatpush1.msra.mxu0 0.0
        %1155 = vmatprep.subr.mxu0 0.0
        %1156 = vmatpush1.msra.mxu0 0.0
        %1157 = vmatprep.subr.mxu0 0.0
        %1158 = vmatpush1.msra.mxu0 0.0
        %1159 = vmatprep.mubr.f32.mxu0 0.0
        %1160 = vmatmul.mubr.f32.gmra.mrb[0].mxu0 %v1093
        %v1161 = vpop.f32.mrb[0].mxu0
        %v1162 = vadd.f32 0.0, %v1161
        %v1163 = vpop.f32.mrb[0].mxu0
        %1164 = vdwg.mxu0
        %v1165 = vadd.f32 %v1090, %v1162
        %v1166 = vsub.f32 0.0, %v1165
        %v1167 = vmul.f32 %v1166, 1.442695
        %v1168 = vpow.pop %v1167
        %v1169 = vadd.f32 %v1168, 1.0
        %v1170 = vrcp.pop %v1169
        %v1171 = vmul.f32 1.0, %v1170
        %v1172 = vtanh.pop %v1165
        %v1173 = vmul.f32 %v1171, %v968
        %1175 = vrot.lane.b32.xlu0 %v1172, 64
        %v1176 = vpop.permute.xlu0 %1175
        %v1178 = vmul.f32 %v1171, %v1176
        %1180 = vrot.lane.b32.xlu0 %v1178, 32
        %v1181 = vpop.permute.xlu0 %1180
        %v1183 = vadd.f32 %v1173, %v1181
        %v1184 = vtanh.pop %v1183
        %1186 = vrot.lane.b32.xlu0 %v1184, 64
        %v1187 = vpop.permute.xlu0 %1186
        %v1189 = vmul.f32 %v1171, %v1187
        %v1191 = vcombine.high %v1189, %v1189
        %v1193 = vunpack.c.l.s4 1966171168
        %v1194 = vunpack.c.0.s8 %v1193
        %v1195 = vlaneseq
        %v1196 = vshrl.u32 %v1195, 7
        %v1197 = vsub.s32 %v1194, %v1196
        %v1198 = vrot.slane %v1189, %v1197
        %v1200 = vunpack.c.l.s4 1966171168
        %v1201 = vunpack.c.0.s8 %v1200
        %v1202 = vlaneseq
        %v1203 = vshrl.u32 %v1202, 7
        %v1204 = vsub.s32 %v1201, %v1203
        %v1205 = vrot.slane %v1191, %v1204
        %v1206 = vcombine.high %v1198, %v1198
        %v1207 = vcombine.high %v1205, %v1205
        %v1209 = vunpack.c.l.s4 1966171168
        %v1210 = vunpack.c.0.s8 %v1209
        %v1211 = vlaneseq
        %v1212 = vshrl.u32 %v1211, 7
        %v1213 = vsub.s32 %v1210, %v1212
        %v1214 = vrot.slane %v1198, %v1213
        %v1216 = vunpack.c.l.s4 1966171168
        %v1217 = vunpack.c.0.s8 %v1216
        %v1218 = vlaneseq
        %v1219 = vshrl.u32 %v1218, 7
        %v1220 = vsub.s32 %v1217, %v1219
        %v1221 = vrot.slane %v1205, %v1220
        %v1223 = vunpack.c.l.s4 1966171168
        %v1224 = vunpack.c.0.s8 %v1223
        %v1225 = vlaneseq
        %v1226 = vshrl.u32 %v1225, 7
        %v1227 = vsub.s32 %v1224, %v1226
        %v1228 = vrot.slane %v1206, %v1227
        %v1230 = vunpack.c.l.s4 1966171168
        %v1231 = vunpack.c.0.s8 %v1230
        %v1232 = vlaneseq
        %v1233 = vshrl.u32 %v1232, 7
        %v1234 = vsub.s32 %v1231, %v1233
        %v1235 = vrot.slane %v1207, %v1234
        %v1236 = vcombine.high %v1214, %v1214
        %v1237 = vcombine.high %v1221, %v1221
        %v1238 = vcombine.high %v1228, %v1228
        %v1239 = vcombine.high %v1235, %v1235
        %v1240 = vlaneseq
        %v1241 = vshrl.u32 %v1240, 7
        %v1242 = vsub.s32 0, %v1241
        %v1243 = vrot.slane %v1214, %v1242
        %v1244 = vlaneseq
        %v1245 = vshrl.u32 %v1244, 7
        %v1246 = vsub.s32 0, %v1245
        %v1247 = vrot.slane %v1228, %v1246
        %v1248 = vlaneseq
        %v1249 = vshrl.u32 %v1248, 7
        %v1250 = vsub.s32 0, %v1249
        %v1251 = vrot.slane %v1236, %v1250
        %v1252 = vlaneseq
        %v1253 = vshrl.u32 %v1252, 7
        %v1254 = vsub.s32 0, %v1253
        %v1255 = vrot.slane %v1238, %v1254
        %v1256 = vlaneseq
        %v1257 = vshrl.u32 %v1256, 7
        %v1258 = vsub.s32 0, %v1257
        %v1259 = vrot.slane %v1221, %v1258
        %v1260 = vlaneseq
        %v1261 = vshrl.u32 %v1260, 7
        %v1262 = vsub.s32 0, %v1261
        %v1263 = vrot.slane %v1235, %v1262
        %v1264 = vlaneseq
        %v1265 = vshrl.u32 %v1264, 7
        %v1266 = vsub.s32 0, %v1265
        %v1267 = vrot.slane %v1237, %v1266
        %v1268 = vlaneseq
        %v1269 = vshrl.u32 %v1268, 7
        %v1270 = vsub.s32 0, %v1269
        %v1271 = vrot.slane %v1239, %v1270
        %1272 = vrot.lane.b32.xlu0 %v1243, 32
        %v1273 = vpop.permute.xlu0 %1272
        %1274 = vrot.lane.b32.xlu0 %v1247, 32
        %v1275 = vpop.permute.xlu0 %1274
        %1276 = vrot.lane.b32.xlu0 %v1251, 32
        %v1277 = vpop.permute.xlu0 %1276
        %1278 = vrot.lane.b32.xlu0 %v1255, 32
        %v1279 = vpop.permute.xlu0 %1278
        %1280 = vrot.lane.b32.xlu0 %v1259, 32
        %v1281 = vpop.permute.xlu0 %1280
        %1282 = vrot.lane.b32.xlu0 %v1263, 32
        %v1283 = vpop.permute.xlu0 %1282
        %1284 = vrot.lane.b32.xlu0 %v1267, 32
        %v1285 = vpop.permute.xlu0 %1284
        %1286 = vrot.lane.b32.xlu0 %v1271, 32
        %v1287 = vpop.permute.xlu0 %1286
        %1296 = vst.msk [vmem:[%s261 + $0x3] sm:$0x1] %vm650, %v1273
        %1297 = vst.msk [vmem:[%s261 + $0xb] sm:$0x1] %vm650, %v1275
        %1298 = vst.msk [vmem:[%s261 + $0x13] sm:$0x1] %vm650, %v1277
        %1299 = vst.msk [vmem:[%s261 + $0x1b] sm:$0x1] %vm650, %v1279
        %1300 = vst.msk [vmem:[%s261 + $0x23] sm:$0x1] %vm650, %v1281
        %1301 = vst.msk [vmem:[%s261 + $0x2b] sm:$0x1] %vm650, %v1283
        %1302 = vst.msk [vmem:[%s261 + $0x33] sm:$0x1] %vm650, %v1285
        %1303 = vst.msk [vmem:[%s261 + $0x3b] sm:$0x1] %vm650, %v1287
        %s1304 = scalar_lea.vmem [#allocation4], 32
        %v1305 = vld [vmem:[%s1304] sm:$0xff]
        %1306 = vrot.lane.b32.xlu0 %v1189, 32
        %v1307 = vpop.permute.xlu0 %1306
        %v1308 = vsel %vm441, %v1307, 0
        %1310 = vmatprep.subr.mxu0 0.0
        %1311 = vmatpush1.msra.mxu0 %v273
        %1312 = vmatprep.subr.mxu0 0.0
        %1313 = vmatpush1.msra.mxu0 %v274
        %1314 = vmatprep.subr.mxu0 0.0
        %1315 = vmatpush1.msra.mxu0 %v275
        %1316 = vmatprep.subr.mxu0 0.0
        %1317 = vmatpush1.msra.mxu0 %v276
        %1318 = vmatprep.subr.mxu0 0.0
        %1319 = vmatpush1.msra.mxu0 0.0
        %1320 = vmatprep.subr.mxu0 0.0
        %1321 = vmatpush1.msra.mxu0 0.0
        %1322 = vmatprep.subr.mxu0 0.0
        %1323 = vmatpush1.msra.mxu0 0.0
        %1324 = vmatprep.subr.mxu0 0.0
        %1325 = vmatpush1.msra.mxu0 0.0
        %1326 = vmatprep.subr.mxu0 0.0
        %1327 = vmatpush1.msra.mxu0 0.0
        %1328 = vmatprep.subr.mxu0 0.0
        %1329 = vmatpush1.msra.mxu0 0.0
        %1330 = vmatprep.subr.mxu0 0.0
        %1331 = vmatpush1.msra.mxu0 0.0
        %1332 = vmatprep.subr.mxu0 0.0
        %1333 = vmatpush1.msra.mxu0 0.0
        %1334 = vmatprep.subr.mxu0 0.0
        %1335 = vmatpush1.msra.mxu0 0.0
        %1336 = vmatprep.subr.mxu0 0.0
        %1337 = vmatpush1.msra.mxu0 0.0
        %1338 = vmatprep.subr.mxu0 0.0
        %1339 = vmatpush1.msra.mxu0 0.0
        %1340 = vmatprep.subr.mxu0 0.0
        %1341 = vmatpush1.msra.mxu0 0.0
        %1342 = vmatprep.subr.mxu0 0.0
        %1343 = vmatpush1.msra.mxu0 0.0
        %1344 = vmatprep.subr.mxu0 0.0
        %1345 = vmatpush1.msra.mxu0 0.0
        %1346 = vmatprep.subr.mxu0 0.0
        %1347 = vmatpush1.msra.mxu0 0.0
        %1348 = vmatprep.subr.mxu0 0.0
        %1349 = vmatpush1.msra.mxu0 0.0
        %1350 = vmatprep.subr.mxu0 0.0
        %1351 = vmatpush1.msra.mxu0 0.0
        %1352 = vmatprep.subr.mxu0 0.0
        %1353 = vmatpush1.msra.mxu0 0.0
        %1354 = vmatprep.subr.mxu0 0.0
        %1355 = vmatpush1.msra.mxu0 0.0
        %1356 = vmatprep.subr.mxu0 0.0
        %1357 = vmatpush1.msra.mxu0 0.0
        %1358 = vmatprep.subr.mxu0 0.0
        %1359 = vmatpush1.msra.mxu0 0.0
        %1360 = vmatprep.subr.mxu0 0.0
        %1361 = vmatpush1.msra.mxu0 0.0
        %1362 = vmatprep.subr.mxu0 0.0
        %1363 = vmatpush1.msra.mxu0 0.0
        %1364 = vmatprep.subr.mxu0 0.0
        %1365 = vmatpush1.msra.mxu0 0.0
        %1366 = vmatprep.subr.mxu0 0.0
        %1367 = vmatpush1.msra.mxu0 0.0
        %1368 = vmatprep.subr.mxu0 0.0
        %1369 = vmatpush1.msra.mxu0 0.0
        %1370 = vmatprep.subr.mxu0 0.0
        %1371 = vmatpush1.msra.mxu0 0.0
        %1372 = vmatprep.subr.mxu0 0.0
        %1373 = vmatpush1.msra.mxu0 0.0
        %1374 = vmatprep.mubr.f32.mxu0 0.0
        %1375 = vmatmul.mubr.f32.gmra.mrb[0].mxu0 %v1308
        %v1376 = vpop.f32.mrb[0].mxu0
        %v1377 = vadd.f32 0.0, %v1376
        %v1378 = vpop.f32.mrb[0].mxu0
        %1379 = vdwg.mxu0
        %v1380 = vadd.f32 %v1305, %v1377
        %v1381 = vsub.f32 0.0, %v1380
        %v1382 = vmul.f32 %v1381, 1.442695
        %v1383 = vpow.pop %v1382
        %v1384 = vadd.f32 %v1383, 1.0
        %v1385 = vrcp.pop %v1384
        %v1386 = vmul.f32 1.0, %v1385
        %v1387 = vtanh.pop %v1380
        %v1388 = vmul.f32 %v1386, %v1183
        %1390 = vrot.lane.b32.xlu0 %v1387, 64
        %v1391 = vpop.permute.xlu0 %1390
        %v1393 = vmul.f32 %v1386, %v1391
        %1395 = vrot.lane.b32.xlu0 %v1393, 32
        %v1396 = vpop.permute.xlu0 %1395
        %v1398 = vadd.f32 %v1388, %v1396
        %v1399 = vtanh.pop %v1398
        %1401 = vrot.lane.b32.xlu0 %v1399, 64
        %v1402 = vpop.permute.xlu0 %1401
        %v1404 = vmul.f32 %v1386, %v1402
        %v1406 = vcombine.high %v1404, %v1404
        %v1408 = vunpack.c.l.s4 1966171168
        %v1409 = vunpack.c.0.s8 %v1408
        %v1410 = vlaneseq
        %v1411 = vshrl.u32 %v1410, 7
        %v1412 = vsub.s32 %v1409, %v1411
        %v1413 = vrot.slane %v1404, %v1412
        %v1415 = vunpack.c.l.s4 1966171168
        %v1416 = vunpack.c.0.s8 %v1415
        %v1417 = vlaneseq
        %v1418 = vshrl.u32 %v1417, 7
        %v1419 = vsub.s32 %v1416, %v1418
        %v1420 = vrot.slane %v1406, %v1419
        %v1421 = vcombine.high %v1413, %v1413
        %v1422 = vcombine.high %v1420, %v1420
        %v1424 = vunpack.c.l.s4 1966171168
        %v1425 = vunpack.c.0.s8 %v1424
        %v1426 = vlaneseq
        %v1427 = vshrl.u32 %v1426, 7
        %v1428 = vsub.s32 %v1425, %v1427
        %v1429 = vrot.slane %v1413, %v1428
        %v1431 = vunpack.c.l.s4 1966171168
        %v1432 = vunpack.c.0.s8 %v1431
        %v1433 = vlaneseq
        %v1434 = vshrl.u32 %v1433, 7
        %v1435 = vsub.s32 %v1432, %v1434
        %v1436 = vrot.slane %v1420, %v1435
        %v1438 = vunpack.c.l.s4 1966171168
        %v1439 = vunpack.c.0.s8 %v1438
        %v1440 = vlaneseq
        %v1441 = vshrl.u32 %v1440, 7
        %v1442 = vsub.s32 %v1439, %v1441
        %v1443 = vrot.slane %v1421, %v1442
        %v1445 = vunpack.c.l.s4 1966171168
        %v1446 = vunpack.c.0.s8 %v1445
        %v1447 = vlaneseq
        %v1448 = vshrl.u32 %v1447, 7
        %v1449 = vsub.s32 %v1446, %v1448
        %v1450 = vrot.slane %v1422, %v1449
        %v1451 = vcombine.high %v1429, %v1429
        %v1452 = vcombine.high %v1436, %v1436
        %v1453 = vcombine.high %v1443, %v1443
        %v1454 = vcombine.high %v1450, %v1450
        %v1455 = vlaneseq
        %v1456 = vshrl.u32 %v1455, 7
        %v1457 = vsub.s32 0, %v1456
        %v1458 = vrot.slane %v1429, %v1457
        %v1459 = vlaneseq
        %v1460 = vshrl.u32 %v1459, 7
        %v1461 = vsub.s32 0, %v1460
        %v1462 = vrot.slane %v1443, %v1461
        %v1463 = vlaneseq
        %v1464 = vshrl.u32 %v1463, 7
        %v1465 = vsub.s32 0, %v1464
        %v1466 = vrot.slane %v1451, %v1465
        %v1467 = vlaneseq
        %v1468 = vshrl.u32 %v1467, 7
        %v1469 = vsub.s32 0, %v1468
        %v1470 = vrot.slane %v1453, %v1469
        %v1471 = vlaneseq
        %v1472 = vshrl.u32 %v1471, 7
        %v1473 = vsub.s32 0, %v1472
        %v1474 = vrot.slane %v1436, %v1473
        %v1475 = vlaneseq
        %v1476 = vshrl.u32 %v1475, 7
        %v1477 = vsub.s32 0, %v1476
        %v1478 = vrot.slane %v1450, %v1477
        %v1479 = vlaneseq
        %v1480 = vshrl.u32 %v1479, 7
        %v1481 = vsub.s32 0, %v1480
        %v1482 = vrot.slane %v1452, %v1481
        %v1483 = vlaneseq
        %v1484 = vshrl.u32 %v1483, 7
        %v1485 = vsub.s32 0, %v1484
        %v1486 = vrot.slane %v1454, %v1485
        %1487 = vrot.lane.b32.xlu0 %v1458, 32
        %v1488 = vpop.permute.xlu0 %1487
        %1489 = vrot.lane.b32.xlu0 %v1462, 32
        %v1490 = vpop.permute.xlu0 %1489
        %1491 = vrot.lane.b32.xlu0 %v1466, 32
        %v1492 = vpop.permute.xlu0 %1491
        %1493 = vrot.lane.b32.xlu0 %v1470, 32
        %v1494 = vpop.permute.xlu0 %1493
        %1495 = vrot.lane.b32.xlu0 %v1474, 32
        %v1496 = vpop.permute.xlu0 %1495
        %1497 = vrot.lane.b32.xlu0 %v1478, 32
        %v1498 = vpop.permute.xlu0 %1497
        %1499 = vrot.lane.b32.xlu0 %v1482, 32
        %v1500 = vpop.permute.xlu0 %1499
        %1501 = vrot.lane.b32.xlu0 %v1486, 32
        %v1502 = vpop.permute.xlu0 %1501
        %1511 = vst.msk [vmem:[%s261 + $0x4] sm:$0x1] %vm650, %v1488
        %1512 = vst.msk [vmem:[%s261 + $0xc] sm:$0x1] %vm650, %v1490
        %1513 = vst.msk [vmem:[%s261 + $0x14] sm:$0x1] %vm650, %v1492
        %1514 = vst.msk [vmem:[%s261 + $0x1c] sm:$0x1] %vm650, %v1494
        %1515 = vst.msk [vmem:[%s261 + $0x24] sm:$0x1] %vm650, %v1496
        %1516 = vst.msk [vmem:[%s261 + $0x2c] sm:$0x1] %vm650, %v1498
        %1517 = vst.msk [vmem:[%s261 + $0x34] sm:$0x1] %vm650, %v1500
        %1518 = vst.msk [vmem:[%s261 + $0x3c] sm:$0x1] %vm650, %v1502
        %s1519 = scalar_lea.vmem [#allocation4], 40
        %v1520 = vld [vmem:[%s1519] sm:$0xff]
        %1521 = vrot.lane.b32.xlu0 %v1404, 32
        %v1522 = vpop.permute.xlu0 %1521
        %v1523 = vsel %vm441, %v1522, 0
        %1525 = vmatprep.subr.mxu0 0.0
        %1526 = vmatpush1.msra.mxu0 %v273
        %1527 = vmatprep.subr.mxu0 0.0
        %1528 = vmatpush1.msra.mxu0 %v274
        %1529 = vmatprep.subr.mxu0 0.0
        %1530 = vmatpush1.msra.mxu0 %v275
        %1531 = vmatprep.subr.mxu0 0.0
        %1532 = vmatpush1.msra.mxu0 %v276
        %1533 = vmatprep.subr.mxu0 0.0
        %1534 = vmatpush1.msra.mxu0 0.0
        %1535 = vmatprep.subr.mxu0 0.0
        %1536 = vmatpush1.msra.mxu0 0.0
        %1537 = vmatprep.subr.mxu0 0.0
        %1538 = vmatpush1.msra.mxu0 0.0
        %1539 = vmatprep.subr.mxu0 0.0
        %1540 = vmatpush1.msra.mxu0 0.0
        %1541 = vmatprep.subr.mxu0 0.0
        %1542 = vmatpush1.msra.mxu0 0.0
        %1543 = vmatprep.subr.mxu0 0.0
        %1544 = vmatpush1.msra.mxu0 0.0
        %1545 = vmatprep.subr.mxu0 0.0
        %1546 = vmatpush1.msra.mxu0 0.0
        %1547 = vmatprep.subr.mxu0 0.0
        %1548 = vmatpush1.msra.mxu0 0.0
        %1549 = vmatprep.subr.mxu0 0.0
        %1550 = vmatpush1.msra.mxu0 0.0
        %1551 = vmatprep.subr.mxu0 0.0
        %1552 = vmatpush1.msra.mxu0 0.0
        %1553 = vmatprep.subr.mxu0 0.0
        %1554 = vmatpush1.msra.mxu0 0.0
        %1555 = vmatprep.subr.mxu0 0.0
        %1556 = vmatpush1.msra.mxu0 0.0
        %1557 = vmatprep.subr.mxu0 0.0
        %1558 = vmatpush1.msra.mxu0 0.0
        %1559 = vmatprep.subr.mxu0 0.0
        %1560 = vmatpush1.msra.mxu0 0.0
        %1561 = vmatprep.subr.mxu0 0.0
        %1562 = vmatpush1.msra.mxu0 0.0
        %1563 = vmatprep.subr.mxu0 0.0
        %1564 = vmatpush1.msra.mxu0 0.0
        %1565 = vmatprep.subr.mxu0 0.0
        %1566 = vmatpush1.msra.mxu0 0.0
        %1567 = vmatprep.subr.mxu0 0.0
        %1568 = vmatpush1.msra.mxu0 0.0
        %1569 = vmatprep.subr.mxu0 0.0
        %1570 = vmatpush1.msra.mxu0 0.0
        %1571 = vmatprep.subr.mxu0 0.0
        %1572 = vmatpush1.msra.mxu0 0.0
        %1573 = vmatprep.subr.mxu0 0.0
        %1574 = vmatpush1.msra.mxu0 0.0
        %1575 = vmatprep.subr.mxu0 0.0
        %1576 = vmatpush1.msra.mxu0 0.0
        %1577 = vmatprep.subr.mxu0 0.0
        %1578 = vmatpush1.msra.mxu0 0.0
        %1579 = vmatprep.subr.mxu0 0.0
        %1580 = vmatpush1.msra.mxu0 0.0
        %1581 = vmatprep.subr.mxu0 0.0
        %1582 = vmatpush1.msra.mxu0 0.0
        %1583 = vmatprep.subr.mxu0 0.0
        %1584 = vmatpush1.msra.mxu0 0.0
        %1585 = vmatprep.subr.mxu0 0.0
        %1586 = vmatpush1.msra.mxu0 0.0
        %1587 = vmatprep.subr.mxu0 0.0
        %1588 = vmatpush1.msra.mxu0 0.0
        %1589 = vmatprep.mubr.f32.mxu0 0.0
        %1590 = vmatmul.mubr.f32.gmra.mrb[0].mxu0 %v1523
        %v1591 = vpop.f32.mrb[0].mxu0
        %v1592 = vadd.f32 0.0, %v1591
        %v1593 = vpop.f32.mrb[0].mxu0
        %1594 = vdwg.mxu0
        %v1595 = vadd.f32 %v1520, %v1592
        %v1596 = vsub.f32 0.0, %v1595
        %v1597 = vmul.f32 %v1596, 1.442695
        %v1598 = vpow.pop %v1597
        %v1599 = vadd.f32 %v1598, 1.0
        %v1600 = vrcp.pop %v1599
        %v1601 = vmul.f32 1.0, %v1600
        %v1602 = vtanh.pop %v1595
        %v1603 = vmul.f32 %v1601, %v1398
        %1605 = vrot.lane.b32.xlu0 %v1602, 64
        %v1606 = vpop.permute.xlu0 %1605
        %v1608 = vmul.f32 %v1601, %v1606
        %1610 = vrot.lane.b32.xlu0 %v1608, 32
        %v1611 = vpop.permute.xlu0 %1610
        %v1613 = vadd.f32 %v1603, %v1611
        %v1614 = vtanh.pop %v1613
        %1616 = vrot.lane.b32.xlu0 %v1614, 64
        %v1617 = vpop.permute.xlu0 %1616
        %v1619 = vmul.f32 %v1601, %v1617
        %v1621 = vcombine.high %v1619, %v1619
        %v1623 = vunpack.c.l.s4 1966171168
        %v1624 = vunpack.c.0.s8 %v1623
        %v1625 = vlaneseq
        %v1626 = vshrl.u32 %v1625, 7
        %v1627 = vsub.s32 %v1624, %v1626
        %v1628 = vrot.slane %v1619, %v1627
        %v1630 = vunpack.c.l.s4 1966171168
        %v1631 = vunpack.c.0.s8 %v1630
        %v1632 = vlaneseq
        %v1633 = vshrl.u32 %v1632, 7
        %v1634 = vsub.s32 %v1631, %v1633
        %v1635 = vrot.slane %v1621, %v1634
        %v1636 = vcombine.high %v1628, %v1628
        %v1637 = vcombine.high %v1635, %v1635
        %v1639 = vunpack.c.l.s4 1966171168
        %v1640 = vunpack.c.0.s8 %v1639
        %v1641 = vlaneseq
        %v1642 = vshrl.u32 %v1641, 7
        %v1643 = vsub.s32 %v1640, %v1642
        %v1644 = vrot.slane %v1628, %v1643
        %v1646 = vunpack.c.l.s4 1966171168
        %v1647 = vunpack.c.0.s8 %v1646
        %v1648 = vlaneseq
        %v1649 = vshrl.u32 %v1648, 7
        %v1650 = vsub.s32 %v1647, %v1649
        %v1651 = vrot.slane %v1635, %v1650
        %v1653 = vunpack.c.l.s4 1966171168
        %v1654 = vunpack.c.0.s8 %v1653
        %v1655 = vlaneseq
        %v1656 = vshrl.u32 %v1655, 7
        %v1657 = vsub.s32 %v1654, %v1656
        %v1658 = vrot.slane %v1636, %v1657
        %v1660 = vunpack.c.l.s4 1966171168
        %v1661 = vunpack.c.0.s8 %v1660
        %v1662 = vlaneseq
        %v1663 = vshrl.u32 %v1662, 7
        %v1664 = vsub.s32 %v1661, %v1663
        %v1665 = vrot.slane %v1637, %v1664
        %v1666 = vcombine.high %v1644, %v1644
        %v1667 = vcombine.high %v1651, %v1651
        %v1668 = vcombine.high %v1658, %v1658
        %v1669 = vcombine.high %v1665, %v1665
        %v1670 = vlaneseq
        %v1671 = vshrl.u32 %v1670, 7
        %v1672 = vsub.s32 0, %v1671
        %v1673 = vrot.slane %v1644, %v1672
        %v1674 = vlaneseq
        %v1675 = vshrl.u32 %v1674, 7
        %v1676 = vsub.s32 0, %v1675
        %v1677 = vrot.slane %v1658, %v1676
        %v1678 = vlaneseq
        %v1679 = vshrl.u32 %v1678, 7
        %v1680 = vsub.s32 0, %v1679
        %v1681 = vrot.slane %v1666, %v1680
        %v1682 = vlaneseq
        %v1683 = vshrl.u32 %v1682, 7
        %v1684 = vsub.s32 0, %v1683
        %v1685 = vrot.slane %v1668, %v1684
        %v1686 = vlaneseq
        %v1687 = vshrl.u32 %v1686, 7
        %v1688 = vsub.s32 0, %v1687
        %v1689 = vrot.slane %v1651, %v1688
        %v1690 = vlaneseq
        %v1691 = vshrl.u32 %v1690, 7
        %v1692 = vsub.s32 0, %v1691
        %v1693 = vrot.slane %v1665, %v1692
        %v1694 = vlaneseq
        %v1695 = vshrl.u32 %v1694, 7
        %v1696 = vsub.s32 0, %v1695
        %v1697 = vrot.slane %v1667, %v1696
        %v1698 = vlaneseq
        %v1699 = vshrl.u32 %v1698, 7
        %v1700 = vsub.s32 0, %v1699
        %v1701 = vrot.slane %v1669, %v1700
        %1702 = vrot.lane.b32.xlu0 %v1673, 32
        %v1703 = vpop.permute.xlu0 %1702
        %1704 = vrot.lane.b32.xlu0 %v1677, 32
        %v1705 = vpop.permute.xlu0 %1704
        %1706 = vrot.lane.b32.xlu0 %v1681, 32
        %v1707 = vpop.permute.xlu0 %1706
        %1708 = vrot.lane.b32.xlu0 %v1685, 32
        %v1709 = vpop.permute.xlu0 %1708
        %1710 = vrot.lane.b32.xlu0 %v1689, 32
        %v1711 = vpop.permute.xlu0 %1710
        %1712 = vrot.lane.b32.xlu0 %v1693, 32
        %v1713 = vpop.permute.xlu0 %1712
        %1714 = vrot.lane.b32.xlu0 %v1697, 32
        %v1715 = vpop.permute.xlu0 %1714
        %1716 = vrot.lane.b32.xlu0 %v1701, 32
        %v1717 = vpop.permute.xlu0 %1716
        %1726 = vst.msk [vmem:[%s261 + $0x5] sm:$0x1] %vm650, %v1703
        %1727 = vst.msk [vmem:[%s261 + $0xd] sm:$0x1] %vm650, %v1705
        %1728 = vst.msk [vmem:[%s261 + $0x15] sm:$0x1] %vm650, %v1707
        %1729 = vst.msk [vmem:[%s261 + $0x1d] sm:$0x1] %vm650, %v1709
        %1730 = vst.msk [vmem:[%s261 + $0x25] sm:$0x1] %vm650, %v1711
        %1731 = vst.msk [vmem:[%s261 + $0x2d] sm:$0x1] %vm650, %v1713
        %1732 = vst.msk [vmem:[%s261 + $0x35] sm:$0x1] %vm650, %v1715
        %1733 = vst.msk [vmem:[%s261 + $0x3d] sm:$0x1] %vm650, %v1717
        %s1734 = scalar_lea.vmem [#allocation4], 48
        %v1735 = vld [vmem:[%s1734] sm:$0xff]
        %1736 = vrot.lane.b32.xlu0 %v1619, 32
        %v1737 = vpop.permute.xlu0 %1736
        %v1738 = vsel %vm441, %v1737, 0
        %1740 = vmatprep.subr.mxu0 0.0
        %1741 = vmatpush1.msra.mxu0 %v273
        %1742 = vmatprep.subr.mxu0 0.0
        %1743 = vmatpush1.msra.mxu0 %v274
        %1744 = vmatprep.subr.mxu0 0.0
        %1745 = vmatpush1.msra.mxu0 %v275
        %1746 = vmatprep.subr.mxu0 0.0
        %1747 = vmatpush1.msra.mxu0 %v276
        %1748 = vmatprep.subr.mxu0 0.0
        %1749 = vmatpush1.msra.mxu0 0.0
        %1750 = vmatprep.subr.mxu0 0.0
        %1751 = vmatpush1.msra.mxu0 0.0
        %1752 = vmatprep.subr.mxu0 0.0
        %1753 = vmatpush1.msra.mxu0 0.0
        %1754 = vmatprep.subr.mxu0 0.0
        %1755 = vmatpush1.msra.mxu0 0.0
        %1756 = vmatprep.subr.mxu0 0.0
        %1757 = vmatpush1.msra.mxu0 0.0
        %1758 = vmatprep.subr.mxu0 0.0
        %1759 = vmatpush1.msra.mxu0 0.0
        %1760 = vmatprep.subr.mxu0 0.0
        %1761 = vmatpush1.msra.mxu0 0.0
        %1762 = vmatprep.subr.mxu0 0.0
        %1763 = vmatpush1.msra.mxu0 0.0
        %1764 = vmatprep.subr.mxu0 0.0
        %1765 = vmatpush1.msra.mxu0 0.0
        %1766 = vmatprep.subr.mxu0 0.0
        %1767 = vmatpush1.msra.mxu0 0.0
        %1768 = vmatprep.subr.mxu0 0.0
        %1769 = vmatpush1.msra.mxu0 0.0
        %1770 = vmatprep.subr.mxu0 0.0
        %1771 = vmatpush1.msra.mxu0 0.0
        %1772 = vmatprep.subr.mxu0 0.0
        %1773 = vmatpush1.msra.mxu0 0.0
        %1774 = vmatprep.subr.mxu0 0.0
        %1775 = vmatpush1.msra.mxu0 0.0
        %1776 = vmatprep.subr.mxu0 0.0
        %1777 = vmatpush1.msra.mxu0 0.0
        %1778 = vmatprep.subr.mxu0 0.0
        %1779 = vmatpush1.msra.mxu0 0.0
        %1780 = vmatprep.subr.mxu0 0.0
        %1781 = vmatpush1.msra.mxu0 0.0
        %1782 = vmatprep.subr.mxu0 0.0
        %1783 = vmatpush1.msra.mxu0 0.0
        %1784 = vmatprep.subr.mxu0 0.0
        %1785 = vmatpush1.msra.mxu0 0.0
        %1786 = vmatprep.subr.mxu0 0.0
        %1787 = vmatpush1.msra.mxu0 0.0
        %1788 = vmatprep.subr.mxu0 0.0
        %1789 = vmatpush1.msra.mxu0 0.0
        %1790 = vmatprep.subr.mxu0 0.0
        %1791 = vmatpush1.msra.mxu0 0.0
        %1792 = vmatprep.subr.mxu0 0.0
        %1793 = vmatpush1.msra.mxu0 0.0
        %1794 = vmatprep.subr.mxu0 0.0
        %1795 = vmatpush1.msra.mxu0 0.0
        %1796 = vmatprep.subr.mxu0 0.0
        %1797 = vmatpush1.msra.mxu0 0.0
        %1798 = vmatprep.subr.mxu0 0.0
        %1799 = vmatpush1.msra.mxu0 0.0
        %1800 = vmatprep.subr.mxu0 0.0
        %1801 = vmatpush1.msra.mxu0 0.0
        %1802 = vmatprep.subr.mxu0 0.0
        %1803 = vmatpush1.msra.mxu0 0.0
        %1804 = vmatprep.mubr.f32.mxu0 0.0
        %1805 = vmatmul.mubr.f32.gmra.mrb[0].mxu0 %v1738
        %v1806 = vpop.f32.mrb[0].mxu0
        %v1807 = vadd.f32 0.0, %v1806
        %v1808 = vpop.f32.mrb[0].mxu0
        %1809 = vdwg.mxu0
        %v1810 = vadd.f32 %v1735, %v1807
        %v1811 = vsub.f32 0.0, %v1810
        %v1812 = vmul.f32 %v1811, 1.442695
        %v1813 = vpow.pop %v1812
        %v1814 = vadd.f32 %v1813, 1.0
        %v1815 = vrcp.pop %v1814
        %v1816 = vmul.f32 1.0, %v1815
        %v1817 = vtanh.pop %v1810
        %v1818 = vmul.f32 %v1816, %v1613
        %1820 = vrot.lane.b32.xlu0 %v1817, 64
        %v1821 = vpop.permute.xlu0 %1820
        %v1823 = vmul.f32 %v1816, %v1821
        %1825 = vrot.lane.b32.xlu0 %v1823, 32
        %v1826 = vpop.permute.xlu0 %1825
        %v1828 = vadd.f32 %v1818, %v1826
        %v1829 = vtanh.pop %v1828
        %1831 = vrot.lane.b32.xlu0 %v1829, 64
        %v1832 = vpop.permute.xlu0 %1831
        %v1834 = vmul.f32 %v1816, %v1832
        %v1836 = vcombine.high %v1834, %v1834
        %v1838 = vunpack.c.l.s4 1966171168
        %v1839 = vunpack.c.0.s8 %v1838
        %v1840 = vlaneseq
        %v1841 = vshrl.u32 %v1840, 7
        %v1842 = vsub.s32 %v1839, %v1841
        %v1843 = vrot.slane %v1834, %v1842
        %v1845 = vunpack.c.l.s4 1966171168
        %v1846 = vunpack.c.0.s8 %v1845
        %v1847 = vlaneseq
        %v1848 = vshrl.u32 %v1847, 7
        %v1849 = vsub.s32 %v1846, %v1848
        %v1850 = vrot.slane %v1836, %v1849
        %v1851 = vcombine.high %v1843, %v1843
        %v1852 = vcombine.high %v1850, %v1850
        %v1854 = vunpack.c.l.s4 1966171168
        %v1855 = vunpack.c.0.s8 %v1854
        %v1856 = vlaneseq
        %v1857 = vshrl.u32 %v1856, 7
        %v1858 = vsub.s32 %v1855, %v1857
        %v1859 = vrot.slane %v1843, %v1858
        %v1861 = vunpack.c.l.s4 1966171168
        %v1862 = vunpack.c.0.s8 %v1861
        %v1863 = vlaneseq
        %v1864 = vshrl.u32 %v1863, 7
        %v1865 = vsub.s32 %v1862, %v1864
        %v1866 = vrot.slane %v1850, %v1865
        %v1868 = vunpack.c.l.s4 1966171168
        %v1869 = vunpack.c.0.s8 %v1868
        %v1870 = vlaneseq
        %v1871 = vshrl.u32 %v1870, 7
        %v1872 = vsub.s32 %v1869, %v1871
        %v1873 = vrot.slane %v1851, %v1872
        %v1875 = vunpack.c.l.s4 1966171168
        %v1876 = vunpack.c.0.s8 %v1875
        %v1877 = vlaneseq
        %v1878 = vshrl.u32 %v1877, 7
        %v1879 = vsub.s32 %v1876, %v1878
        %v1880 = vrot.slane %v1852, %v1879
        %v1881 = vcombine.high %v1859, %v1859
        %v1882 = vcombine.high %v1866, %v1866
        %v1883 = vcombine.high %v1873, %v1873
        %v1884 = vcombine.high %v1880, %v1880
        %v1885 = vlaneseq
        %v1886 = vshrl.u32 %v1885, 7
        %v1887 = vsub.s32 0, %v1886
        %v1888 = vrot.slane %v1859, %v1887
        %v1889 = vlaneseq
        %v1890 = vshrl.u32 %v1889, 7
        %v1891 = vsub.s32 0, %v1890
        %v1892 = vrot.slane %v1873, %v1891
        %v1893 = vlaneseq
        %v1894 = vshrl.u32 %v1893, 7
        %v1895 = vsub.s32 0, %v1894
        %v1896 = vrot.slane %v1881, %v1895
        %v1897 = vlaneseq
        %v1898 = vshrl.u32 %v1897, 7
        %v1899 = vsub.s32 0, %v1898
        %v1900 = vrot.slane %v1883, %v1899
        %v1901 = vlaneseq
        %v1902 = vshrl.u32 %v1901, 7
        %v1903 = vsub.s32 0, %v1902
        %v1904 = vrot.slane %v1866, %v1903
        %v1905 = vlaneseq
        %v1906 = vshrl.u32 %v1905, 7
        %v1907 = vsub.s32 0, %v1906
        %v1908 = vrot.slane %v1880, %v1907
        %v1909 = vlaneseq
        %v1910 = vshrl.u32 %v1909, 7
        %v1911 = vsub.s32 0, %v1910
        %v1912 = vrot.slane %v1882, %v1911
        %v1913 = vlaneseq
        %v1914 = vshrl.u32 %v1913, 7
        %v1915 = vsub.s32 0, %v1914
        %v1916 = vrot.slane %v1884, %v1915
        %1917 = vrot.lane.b32.xlu0 %v1888, 32
        %v1918 = vpop.permute.xlu0 %1917
        %1919 = vrot.lane.b32.xlu0 %v1892, 32
        %v1920 = vpop.permute.xlu0 %1919
        %1921 = vrot.lane.b32.xlu0 %v1896, 32
        %v1922 = vpop.permute.xlu0 %1921
        %1923 = vrot.lane.b32.xlu0 %v1900, 32
        %v1924 = vpop.permute.xlu0 %1923
        %1925 = vrot.lane.b32.xlu0 %v1904, 32
        %v1926 = vpop.permute.xlu0 %1925
        %1927 = vrot.lane.b32.xlu0 %v1908, 32
        %v1928 = vpop.permute.xlu0 %1927
        %1929 = vrot.lane.b32.xlu0 %v1912, 32
        %v1930 = vpop.permute.xlu0 %1929
        %1931 = vrot.lane.b32.xlu0 %v1916, 32
        %v1932 = vpop.permute.xlu0 %1931
        %1941 = vst.msk [vmem:[%s261 + $0x6] sm:$0x1] %vm650, %v1918
        %1942 = vst.msk [vmem:[%s261 + $0xe] sm:$0x1] %vm650, %v1920
        %1943 = vst.msk [vmem:[%s261 + $0x16] sm:$0x1] %vm650, %v1922
        %1944 = vst.msk [vmem:[%s261 + $0x1e] sm:$0x1] %vm650, %v1924
        %1945 = vst.msk [vmem:[%s261 + $0x26] sm:$0x1] %vm650, %v1926
        %1946 = vst.msk [vmem:[%s261 + $0x2e] sm:$0x1] %vm650, %v1928
        %1947 = vst.msk [vmem:[%s261 + $0x36] sm:$0x1] %vm650, %v1930
        %1948 = vst.msk [vmem:[%s261 + $0x3e] sm:$0x1] %vm650, %v1932
        %s1949 = scalar_lea.vmem [#allocation4], 56
        %v1950 = vld [vmem:[%s1949] sm:$0xff]
        %1951 = vrot.lane.b32.xlu0 %v1834, 32
        %v1952 = vpop.permute.xlu0 %1951
        %v1953 = vsel %vm441, %v1952, 0
        %1955 = vmatprep.subr.mxu0 0.0
        %1956 = vmatpush1.msra.mxu0 %v273
        %1957 = vmatprep.subr.mxu0 0.0
        %1958 = vmatpush1.msra.mxu0 %v274
        %1959 = vmatprep.subr.mxu0 0.0
        %1960 = vmatpush1.msra.mxu0 %v275
        %1961 = vmatprep.subr.mxu0 0.0
        %1962 = vmatpush1.msra.mxu0 %v276
        %1963 = vmatprep.subr.mxu0 0.0
        %1964 = vmatpush1.msra.mxu0 0.0
        %1965 = vmatprep.subr.mxu0 0.0
        %1966 = vmatpush1.msra.mxu0 0.0
        %1967 = vmatprep.subr.mxu0 0.0
        %1968 = vmatpush1.msra.mxu0 0.0
        %1969 = vmatprep.subr.mxu0 0.0
        %1970 = vmatpush1.msra.mxu0 0.0
        %1971 = vmatprep.subr.mxu0 0.0
        %1972 = vmatpush1.msra.mxu0 0.0
        %1973 = vmatprep.subr.mxu0 0.0
        %1974 = vmatpush1.msra.mxu0 0.0
        %1975 = vmatprep.subr.mxu0 0.0
        %1976 = vmatpush1.msra.mxu0 0.0
        %1977 = vmatprep.subr.mxu0 0.0
        %1978 = vmatpush1.msra.mxu0 0.0
        %1979 = vmatprep.subr.mxu0 0.0
        %1980 = vmatpush1.msra.mxu0 0.0
        %1981 = vmatprep.subr.mxu0 0.0
        %1982 = vmatpush1.msra.mxu0 0.0
        %1983 = vmatprep.subr.mxu0 0.0
        %1984 = vmatpush1.msra.mxu0 0.0
        %1985 = vmatprep.subr.mxu0 0.0
        %1986 = vmatpush1.msra.mxu0 0.0
        %1987 = vmatprep.subr.mxu0 0.0
        %1988 = vmatpush1.msra.mxu0 0.0
        %1989 = vmatprep.subr.mxu0 0.0
        %1990 = vmatpush1.msra.mxu0 0.0
        %1991 = vmatprep.subr.mxu0 0.0
        %1992 = vmatpush1.msra.mxu0 0.0
        %1993 = vmatprep.subr.mxu0 0.0
        %1994 = vmatpush1.msra.mxu0 0.0
        %1995 = vmatprep.subr.mxu0 0.0
        %1996 = vmatpush1.msra.mxu0 0.0
        %1997 = vmatprep.subr.mxu0 0.0
        %1998 = vmatpush1.msra.mxu0 0.0
        %1999 = vmatprep.subr.mxu0 0.0
        %2000 = vmatpush1.msra.mxu0 0.0
        %2001 = vmatprep.subr.mxu0 0.0
        %2002 = vmatpush1.msra.mxu0 0.0
        %2003 = vmatprep.subr.mxu0 0.0
        %2004 = vmatpush1.msra.mxu0 0.0
        %2005 = vmatprep.subr.mxu0 0.0
        %2006 = vmatpush1.msra.mxu0 0.0
        %2007 = vmatprep.subr.mxu0 0.0
        %2008 = vmatpush1.msra.mxu0 0.0
        %2009 = vmatprep.subr.mxu0 0.0
        %2010 = vmatpush1.msra.mxu0 0.0
        %2011 = vmatprep.subr.mxu0 0.0
        %2012 = vmatpush1.msra.mxu0 0.0
        %2013 = vmatprep.subr.mxu0 0.0
        %2014 = vmatpush1.msra.mxu0 0.0
        %2015 = vmatprep.subr.mxu0 0.0
        %2016 = vmatpush1.msra.mxu0 0.0
        %2017 = vmatprep.subr.mxu0 0.0
        %2018 = vmatpush1.msra.mxu0 0.0
        %2019 = vmatprep.mubr.f32.mxu0 0.0
        %2020 = vmatmul.mubr.f32.gmra.mrb[0].mxu0 %v1953
        %v2021 = vpop.f32.mrb[0].mxu0
        %v2022 = vadd.f32 0.0, %v2021
        %v2023 = vpop.f32.mrb[0].mxu0
        %2024 = vdwg.mxu0
        %v2025 = vadd.f32 %v1950, %v2022
        %v2026 = vsub.f32 0.0, %v2025
        %v2027 = vmul.f32 %v2026, 1.442695
        %v2028 = vpow.pop %v2027
        %v2029 = vadd.f32 %v2028, 1.0
        %v2030 = vrcp.pop %v2029
        %v2031 = vmul.f32 1.0, %v2030
        %v2032 = vtanh.pop %v2025
        %v2033 = vmul.f32 %v2031, %v1828
        %2035 = vrot.lane.b32.xlu0 %v2032, 64
        %v2036 = vpop.permute.xlu0 %2035
        %v2038 = vmul.f32 %v2031, %v2036
        %2040 = vrot.lane.b32.xlu0 %v2038, 32
        %v2041 = vpop.permute.xlu0 %2040
        %v2043 = vadd.f32 %v2033, %v2041
        %v2044 = vtanh.pop %v2043
        %2046 = vrot.lane.b32.xlu0 %v2044, 64
        %v2047 = vpop.permute.xlu0 %2046
        %v2049 = vmul.f32 %v2031, %v2047
        %v2051 = vcombine.high %v2049, %v2049
        %v2053 = vunpack.c.l.s4 1966171168
        %v2054 = vunpack.c.0.s8 %v2053
        %v2055 = vlaneseq
        %v2056 = vshrl.u32 %v2055, 7
        %v2057 = vsub.s32 %v2054, %v2056
        %v2058 = vrot.slane %v2049, %v2057
        %v2060 = vunpack.c.l.s4 1966171168
        %v2061 = vunpack.c.0.s8 %v2060
        %v2062 = vlaneseq
        %v2063 = vshrl.u32 %v2062, 7
        %v2064 = vsub.s32 %v2061, %v2063
        %v2065 = vrot.slane %v2051, %v2064
        %v2066 = vcombine.high %v2058, %v2058
        %v2067 = vcombine.high %v2065, %v2065
        %v2069 = vunpack.c.l.s4 1966171168
        %v2070 = vunpack.c.0.s8 %v2069
        %v2071 = vlaneseq
        %v2072 = vshrl.u32 %v2071, 7
        %v2073 = vsub.s32 %v2070, %v2072
        %v2074 = vrot.slane %v2058, %v2073
        %v2076 = vunpack.c.l.s4 1966171168
        %v2077 = vunpack.c.0.s8 %v2076
        %v2078 = vlaneseq
        %v2079 = vshrl.u32 %v2078, 7
        %v2080 = vsub.s32 %v2077, %v2079
        %v2081 = vrot.slane %v2065, %v2080
        %v2083 = vunpack.c.l.s4 1966171168
        %v2084 = vunpack.c.0.s8 %v2083
        %v2085 = vlaneseq
        %v2086 = vshrl.u32 %v2085, 7
        %v2087 = vsub.s32 %v2084, %v2086
        %v2088 = vrot.slane %v2066, %v2087
        %v2090 = vunpack.c.l.s4 1966171168
        %v2091 = vunpack.c.0.s8 %v2090
        %v2092 = vlaneseq
        %v2093 = vshrl.u32 %v2092, 7
        %v2094 = vsub.s32 %v2091, %v2093
        %v2095 = vrot.slane %v2067, %v2094
        %v2096 = vcombine.high %v2074, %v2074
        %v2097 = vcombine.high %v2081, %v2081
        %v2098 = vcombine.high %v2088, %v2088
        %v2099 = vcombine.high %v2095, %v2095
        %v2100 = vlaneseq
        %v2101 = vshrl.u32 %v2100, 7
        %v2102 = vsub.s32 0, %v2101
        %v2103 = vrot.slane %v2074, %v2102
        %v2104 = vlaneseq
        %v2105 = vshrl.u32 %v2104, 7
        %v2106 = vsub.s32 0, %v2105
        %v2107 = vrot.slane %v2088, %v2106
        %v2108 = vlaneseq
        %v2109 = vshrl.u32 %v2108, 7
        %v2110 = vsub.s32 0, %v2109
        %v2111 = vrot.slane %v2096, %v2110
        %v2112 = vlaneseq
        %v2113 = vshrl.u32 %v2112, 7
        %v2114 = vsub.s32 0, %v2113
        %v2115 = vrot.slane %v2098, %v2114
        %v2116 = vlaneseq
        %v2117 = vshrl.u32 %v2116, 7
        %v2118 = vsub.s32 0, %v2117
        %v2119 = vrot.slane %v2081, %v2118
        %v2120 = vlaneseq
        %v2121 = vshrl.u32 %v2120, 7
        %v2122 = vsub.s32 0, %v2121
        %v2123 = vrot.slane %v2095, %v2122
        %v2124 = vlaneseq
        %v2125 = vshrl.u32 %v2124, 7
        %v2126 = vsub.s32 0, %v2125
        %v2127 = vrot.slane %v2097, %v2126
        %v2128 = vlaneseq
        %v2129 = vshrl.u32 %v2128, 7
        %v2130 = vsub.s32 0, %v2129
        %v2131 = vrot.slane %v2099, %v2130
        %2132 = vrot.lane.b32.xlu0 %v2103, 32
        %v2133 = vpop.permute.xlu0 %2132
        %2134 = vrot.lane.b32.xlu0 %v2107, 32
        %v2135 = vpop.permute.xlu0 %2134
        %2136 = vrot.lane.b32.xlu0 %v2111, 32
        %v2137 = vpop.permute.xlu0 %2136
        %2138 = vrot.lane.b32.xlu0 %v2115, 32
        %v2139 = vpop.permute.xlu0 %2138
        %2140 = vrot.lane.b32.xlu0 %v2119, 32
        %v2141 = vpop.permute.xlu0 %2140
        %2142 = vrot.lane.b32.xlu0 %v2123, 32
        %v2143 = vpop.permute.xlu0 %2142
        %2144 = vrot.lane.b32.xlu0 %v2127, 32
        %v2145 = vpop.permute.xlu0 %2144
        %2146 = vrot.lane.b32.xlu0 %v2131, 32
        %v2147 = vpop.permute.xlu0 %2146
        %2156 = vst.msk [vmem:[%s261 + $0x7] sm:$0x1] %vm650, %v2133
        %2157 = vst.msk [vmem:[%s261 + $0xf] sm:$0x1] %vm650, %v2135
        %2158 = vst.msk [vmem:[%s261 + $0x17] sm:$0x1] %vm650, %v2137
        %2159 = vst.msk [vmem:[%s261 + $0x1f] sm:$0x1] %vm650, %v2139
        %2160 = vst.msk [vmem:[%s261 + $0x27] sm:$0x1] %vm650, %v2141
        %2161 = vst.msk [vmem:[%s261 + $0x2f] sm:$0x1] %vm650, %v2143
        %2162 = vst.msk [vmem:[%s261 + $0x37] sm:$0x1] %vm650, %v2145
        %2163 = vst.msk [vmem:[%s261 + $0x3f] sm:$0x1] %vm650, %v2147
        %2164 = vrot.lane.b32.xlu0 %v2049, 32
        %v2165 = vpop.permute.xlu0 %2164
        %2167 = vst.msk [vmem:[#allocation2] sm:$0xff] %vm441, %v2165
        %2169 = vrot.lane.b32.xlu0 %v2043, 96
        %v2170 = vpop.permute.xlu0 %2169
        %2172 = vst.msk [vmem:[#allocation3] sm:$0xff] %vm441, %v2170
        %s2173 = sand.u32 %s135, 1
        %s2174 = scalar_lea.sflag [#allocation7], %s2173
        %s2175 = sand.u32 %s135, 1
        %s2176 = smul.addr %s2175, 64
        %s2177 = scalar_lea.vmem [#allocation11], %s2176
        // Predicated region
        $region53: #{tpu_custom_call.1} parent=35 // pred_check
          %p2178 = pneg %p145
        $region54: #{tpu_custom_call.1} parent=35 // pred_check_branch
          %2180 = sbr.rel (%p2178) target = $region56
        $region55: #{tpu_custom_call.1} parent=35 // pred_region
          %s2181 = smul.u32 8, %s26
          %s2183 = ssub.s32 1024, 1024
          %2184 = vsyncadd %s2174, %s2183
          %s2185 = smul.addr %s2181, 2
          %s2186 = sadd.s32 %s27, %s2185
          %s2187 = smul.addr %s2186, 128
          %s2188 = scalar_lea.hbm %s4, %s2187
          %s2189 = sshll.u32 %s2177, 4
          %s2190 = int_to_ptr.vmem [resolvable:$true] %s2189
          %2195 = dma.vmem_to_hbm [thread:$0]  %s2190, 1024, %s2188, %s2174, 128, 256, 8
        $region56: #{tpu_custom_call.1} parent=35 // pred_fallthru
          _
      $region36: #{tpu_custom_call.1} parent=5 // pred_fallthru
        _
      %p2196 = scmp.le.s32.totalorder 2, %s17
      // Predicated region
      $region57: #{tpu_custom_call.1} parent=5 // pred_check
        %p2197 = pneg %p2196
      $region58: #{tpu_custom_call.1} parent=5 // pred_check_branch
        %2199 = sbr.rel (%p2197) target = $region60
      $region59: #{tpu_custom_call.1} parent=5 // pred_region
        %s2200 = ssub.s32 %s17, 2
        // Predicated region
        $region61: #{tpu_custom_call.1} parent=59 // pred_check
          %p2201 = pneg %p151
        $region62: #{tpu_custom_call.1} parent=59 // pred_check_branch
          %2203 = sbr.rel (%p2201) target = $region64
        $region63: #{tpu_custom_call.1} parent=59 // pred_region
          %s2204 = sand.u32 %s136, 1
          %s2205 = scalar_lea.sflag [#allocation7], %s2204
          %s2206 = sand.u32 %s136, 1
          %s2207 = smul.addr %s2206, 64
          %s2208 = scalar_lea.vmem [#allocation11], %s2207
          %2209 = dma.done %s2205, 1024
        $region64: #{tpu_custom_call.1} parent=59 // pred_fallthru
          _
      $region60: #{tpu_custom_call.1} parent=5 // pred_fallthru
        _
    $region6: #{tpu_custom_call.1} parent=1 // loop_footer
      %s21 = sadd.s32 1, %s17
    $region7: #{tpu_custom_call.1} parent=1 // loop_footer_branch
      %16 = sbr.rel target = $region3
    $region8: #{tpu_custom_call.1} parent=1 // loop_exit
      _
    %2210 = vsyncpa [#allocation6], 1
    %s2211 = scalar_lea.sflag [#allocation6], 1
    %2212 = vsyncpa %s2211, 1
    %2213 = vsyncpa [#allocation9], 1
    %2214 = vsyncpa [#allocation7], 1
    %s2215 = scalar_lea.sflag [#allocation7], 1
    %2216 = vsyncpa %s2215, 1

</llo_original>
